<compile_context>
chip_gen: v6e
topology: v6e:2x2x1
jax: 0.10.0
libtpu: 0.0.40
codegen_flags: <defaults>
</compile_context>

<pallas_src>
import jax
import jax.numpy as jnp
from jax.experimental import pallas as pl
from jax.experimental.pallas import tpu as pltpu

LANE = 128  # TPU lane width; feature dims are padded to a multiple of this.


def _round_up(n, m):
    return ((n + m - 1) // m) * m


def _autoencoder_kernel(x_ref,
                        w1_ref, b1_ref, w2_ref, b2_ref,
                        w3_ref, b3_ref, w4_ref, b4_ref,
                        out_ref):
    """Full encoder+decoder chain for one batch tile, entirely in VMEM.

    x / weights are bf16 (lane-padded); biases are f32.  Matmuls accumulate in
    f32 on the MXU; activations are recast to bf16 before the next matmul so
    the MXU always sees native bf16 operands (no 3-pass f32 matmul).
    """
    x = x_ref[...]                                               # bf16 [bt, in_pad]

    # --- encoder ---
    h1 = jnp.dot(x, w1_ref[...], preferred_element_type=jnp.float32) + b1_ref[...]
    h1 = jnp.maximum(h1, 0.0).astype(jnp.bfloat16)               # ReLU (f32 -> bf16)
    z = (jnp.dot(h1, w2_ref[...], preferred_element_type=jnp.float32)
         + b2_ref[...]).astype(jnp.bfloat16)

    # --- decoder ---
    h2 = jnp.dot(z, w3_ref[...], preferred_element_type=jnp.float32) + b3_ref[...]
    h2 = jnp.maximum(h2, 0.0).astype(jnp.bfloat16)               # ReLU
    o = jnp.dot(h2, w4_ref[...], preferred_element_type=jnp.float32) + b4_ref[...]
    o = jax.nn.sigmoid(o)                                        # Sigmoid in f32 (EUP)

    out_ref[...] = o.astype(out_ref.dtype)


def init_params(key, input_dim, hidden_dim=64, latent_dim=8):
    """Deterministic init mimicking nn.Linear (uniform +-1/sqrt(fan_in)).

    Weights stored as [in_features, out_features] (transposed vs torch weight);
    biases as [1, out_features]. All f32 / unpadded -- pack_params() prepares
    the padded bf16 copies fed to the kernel.
    """
    def linear(k, fan_in, fan_out):
        kw, kb = jax.random.split(k)
        bound = 1.0 / jnp.sqrt(fan_in)
        w = jax.random.uniform(kw, (fan_in, fan_out), jnp.float32, -bound, bound)
        b = jax.random.uniform(kb, (1, fan_out), jnp.float32, -bound, bound)
        return w, b

    k1, k2, k3, k4 = jax.random.split(key, 4)
    w1, b1 = linear(k1, input_dim, hidden_dim)   # encoder Linear 1
    w2, b2 = linear(k2, hidden_dim, latent_dim)  # encoder Linear 2
    w3, b3 = linear(k3, latent_dim, hidden_dim)  # decoder Linear 1
    w4, b4 = linear(k4, hidden_dim, input_dim)   # decoder Linear 2
    return dict(w1=w1, b1=b1, w2=w2, b2=b2, w3=w3, b3=b3, w4=w4, b4=b4)


def pack_params(params):
    """Zero-pad every feature dim to a multiple of 128 lanes; weights -> bf16.

    Padded weight rows/cols and bias entries are zero, so the kernel's math on
    the real columns is exactly the unpadded computation.
    """
    input_dim, hidden_dim = params["w1"].shape
    latent_dim = params["w2"].shape[1]
    ip = _round_up(input_dim, LANE)
    hp = _round_up(hidden_dim, LANE)
    lp = _round_up(latent_dim, LANE)

    def pad2(a, rows, cols):
        return jnp.pad(a, ((0, rows - a.shape[0]), (0, cols - a.shape[1])))

    def w(name, rows, cols):
        return pad2(params[name], rows, cols).astype(jnp.bfloat16)

    def b(name, cols):
        return pad2(params[name], 1, cols).astype(jnp.float32)

    return dict(
        w1=w("w1", ip, hp), b1=b("b1", hp),
        w2=w("w2", hp, lp), b2=b("b2", lp),
        w3=w("w3", lp, hp), b3=b("b3", hp),
        w4=w("w4", hp, ip), b4=b("b4", ip),
        input_dim=input_dim,
    )


def autoencoder_forward(x, packed, *, batch_tile=256):
    """x: [B, input_dim] float32.  packed: output of pack_params()."""
    B, input_dim = x.shape
    assert input_dim == packed["input_dim"], "params/input mismatch"
    assert batch_tile % 8 == 0, "batch_tile must be a multiple of 8 (sublanes)"

    in_pad = packed["w1"].shape[0]
    hid_pad = packed["w1"].shape[1]
    lat_pad = packed["w2"].shape[1]

    # Pad batch to a tile multiple and features to the 128-lane padded width
    # (layout plumbing only; padded columns are zero so results are exact).
    b_pad = _round_up(B, batch_tile)
    xp = jnp.pad(x.astype(jnp.bfloat16),
                 ((0, b_pad - B), (0, in_pad - input_dim)))

    grid = (b_pad // batch_tile,)

    # Advisory cost for XLA's scheduler (this kernel is memory-bound).
    weight_names = ("w1", "b1", "w2", "b2", "w3", "b3", "w4", "b4")
    flops = 2 * b_pad * (in_pad * hid_pad + hid_pad * lat_pad
                         + lat_pad * hid_pad + hid_pad * in_pad)
    bytes_accessed = (2 * b_pad * in_pad * 2  # x read + out write, bf16
                      + sum(int(packed[k].size) * packed[k].dtype.itemsize
                            for k in weight_names))
    cost = pl.CostEstimate(flops=flops,
                           transcendentals=b_pad * in_pad,
                           bytes_accessed=bytes_accessed)

    # Weights/biases are small and constant across the grid: load full arrays.
    full = lambda shape: pl.BlockSpec(shape, lambda i: (0, 0))

    out = pl.pallas_call(
        _autoencoder_kernel,
        out_shape=jax.ShapeDtypeStruct((b_pad, in_pad), jnp.bfloat16),
        grid_spec=pltpu.PrefetchScalarGridSpec(
            num_scalar_prefetch=0,
            grid=grid,
            in_specs=[
                pl.BlockSpec((batch_tile, in_pad), lambda i: (i, 0)),  # x tile
                full(packed["w1"].shape), full(packed["b1"].shape),
                full(packed["w2"].shape), full(packed["b2"].shape),
                full(packed["w3"].shape), full(packed["b3"].shape),
                full(packed["w4"].shape), full(packed["b4"].shape),
            ],
            out_specs=pl.BlockSpec((batch_tile, in_pad), lambda i: (i, 0)),
        ),
        compiler_params=pltpu.CompilerParams(
            dimension_semantics=("parallel",)),
        cost_estimate=cost,
    )(xp, packed["w1"], packed["b1"], packed["w2"], packed["b2"],
      packed["w3"], packed["b3"], packed["w4"], packed["b4"])

    # Slice back to the logical shape (drops padded batch rows / lane columns).
    return out[:B, :input_dim]


def autoencoder_ref(x, params):
    """Pure-JAX reference mirroring the kernel's bf16-operand / f32-accum math."""
    bf16, f32 = jnp.bfloat16, jnp.float32

    def dot(a, w):
        return jnp.dot(a.astype(bf16), w.astype(bf16), preferred_element_type=f32)

    h1 = jnp.maximum(dot(x, params["w1"]) + params["b1"], 0.0)
    z = dot(h1, params["w2"]) + params["b2"]
    h2 = jnp.maximum(dot(z, params["w3"]) + params["b3"], 0.0)
    return jax.nn.sigmoid(dot(h2, params["w4"]) + params["b4"])


if __name__ == "__main__":
    key = jax.random.PRNGKey(0)
    kx, kp = jax.random.split(key)

    # Small, module-consistent shapes. batch=512 with batch_tile=256 keeps
    # grid=(2,), so on v7x both TensorCores are used.
    batch, input_dim, hidden_dim, latent_dim = 512, 32, 64, 8
    x = jax.random.normal(kx, (batch, input_dim), jnp.float32)
    params = init_params(kp, input_dim, hidden_dim, latent_dim)
    packed = pack_params(params)

    out = autoencoder_forward(x, packed, batch_tile=256)
    out = jax.block_until_ready(out)

    ref = autoencoder_ref(x, params)
    assert out.shape == (batch, input_dim)
    max_diff = float(jnp.max(jnp.abs(out.astype(jnp.float32) - ref)))
    # Output is bf16 (values in [0,1] after sigmoid) -> quantization <= ~2e-3.
    assert max_diff < 1e-2, f"mismatch vs reference: {max_diff}"

    print("KERNEL_OK")
</pallas_src>

<mosaic_0001>
module attributes {stable_mosaic.version = 11 : i64} {
  func.func @_autoencoder_kernel(%arg0: i32, %arg1: memref<256x128xbf16, #tpu.memory_space<vmem>>, %arg2: memref<128x128xbf16, #tpu.memory_space<vmem>>, %arg3: memref<1x128xf32, #tpu.memory_space<vmem>>, %arg4: memref<128x128xbf16, #tpu.memory_space<vmem>>, %arg5: memref<1x128xf32, #tpu.memory_space<vmem>>, %arg6: memref<128x128xbf16, #tpu.memory_space<vmem>>, %arg7: memref<1x128xf32, #tpu.memory_space<vmem>>, %arg8: memref<128x128xbf16, #tpu.memory_space<vmem>>, %arg9: memref<1x128xf32, #tpu.memory_space<vmem>>, %arg10: memref<256x128xbf16, #tpu.memory_space<vmem>>) attributes {dimension_semantics = [#tpu.dimension_semantics<parallel>], iteration_bounds = array<i64: 2>, scalar_prefetch = 0 : i64, scratch_operands = 0 : i64, tpu.core_type = #tpu.core_type<tc>, window_params = [{transform_indices = @transform_0, window_bounds = array<i64: 256, 128>}, {pipeline_mode = #tpu.pipeline_mode<synchronous>, transform_indices = @transform_1, window_bounds = array<i64: 128, 128>}, {pipeline_mode = #tpu.pipeline_mode<synchronous>, transform_indices = @transform_2, window_bounds = array<i64: 1, 128>}, {pipeline_mode = #tpu.pipeline_mode<synchronous>, transform_indices = @transform_3, window_bounds = array<i64: 128, 128>}, {pipeline_mode = #tpu.pipeline_mode<synchronous>, transform_indices = @transform_4, window_bounds = array<i64: 1, 128>}, {pipeline_mode = #tpu.pipeline_mode<synchronous>, transform_indices = @transform_5, window_bounds = array<i64: 128, 128>}, {pipeline_mode = #tpu.pipeline_mode<synchronous>, transform_indices = @transform_6, window_bounds = array<i64: 1, 128>}, {pipeline_mode = #tpu.pipeline_mode<synchronous>, transform_indices = @transform_7, window_bounds = array<i64: 128, 128>}, {pipeline_mode = #tpu.pipeline_mode<synchronous>, transform_indices = @transform_8, window_bounds = array<i64: 1, 128>}, {transform_indices = @transform_9, window_bounds = array<i64: 256, 128>}]} {
    %c0 = arith.constant 0 : index
    %c0_0 = arith.constant 0 : index
    %0 = vector.load %arg1[%c0, %c0_0] : memref<256x128xbf16, #tpu.memory_space<vmem>>, vector<256x128xbf16>
    %c0_1 = arith.constant 0 : index
    %c0_2 = arith.constant 0 : index
    %1 = vector.load %arg2[%c0_1, %c0_2] : memref<128x128xbf16, #tpu.memory_space<vmem>>, vector<128x128xbf16>
    %cst = arith.constant dense<0.000000e+00> : vector<256x128xf32>
    %2 = tpu.matmul %0, %1, %cst {dimension_numbers = #tpu.dot_dimension_numbers<[1], [0], [0], [1], [0, 0, 1, 1], [], []>} : vector<256x128xbf16>, vector<128x128xbf16>, vector<256x128xf32> -> vector<256x128xf32>
    %c0_3 = arith.constant 0 : index
    %c0_4 = arith.constant 0 : index
    %3 = vector.load %arg3[%c0_3, %c0_4] : memref<1x128xf32, #tpu.memory_space<vmem>>, vector<1x128xf32>
    %4 = vector.broadcast %3 : vector<1x128xf32> to vector<256x128xf32>
    %5 = arith.addf %2, %4 : vector<256x128xf32>
    %cst_5 = arith.constant 0.000000e+00 : f32
    %6 = vector.broadcast %cst_5 : f32 to vector<256x128xf32>
    %7 = arith.maximumf %5, %6 : vector<256x128xf32>
    %8 = arith.truncf %7 : vector<256x128xf32> to vector<256x128xbf16>
    %c0_6 = arith.constant 0 : index
    %c0_7 = arith.constant 0 : index
    %9 = vector.load %arg4[%c0_6, %c0_7] : memref<128x128xbf16, #tpu.memory_space<vmem>>, vector<128x128xbf16>
    %cst_8 = arith.constant dense<0.000000e+00> : vector<256x128xf32>
    %10 = tpu.matmul %8, %9, %cst_8 {dimension_numbers = #tpu.dot_dimension_numbers<[1], [0], [0], [1], [0, 0, 1, 1], [], []>} : vector<256x128xbf16>, vector<128x128xbf16>, vector<256x128xf32> -> vector<256x128xf32>
    %c0_9 = arith.constant 0 : index
    %c0_10 = arith.constant 0 : index
    %11 = vector.load %arg5[%c0_9, %c0_10] : memref<1x128xf32, #tpu.memory_space<vmem>>, vector<1x128xf32>
    %12 = vector.broadcast %11 : vector<1x128xf32> to vector<256x128xf32>
    %13 = arith.addf %10, %12 : vector<256x128xf32>
    %14 = arith.truncf %13 : vector<256x128xf32> to vector<256x128xbf16>
    %c0_11 = arith.constant 0 : index
    %c0_12 = arith.constant 0 : index
    %15 = vector.load %arg6[%c0_11, %c0_12] : memref<128x128xbf16, #tpu.memory_space<vmem>>, vector<128x128xbf16>
    %cst_13 = arith.constant dense<0.000000e+00> : vector<256x128xf32>
    %16 = tpu.matmul %14, %15, %cst_13 {dimension_numbers = #tpu.dot_dimension_numbers<[1], [0], [0], [1], [0, 0, 1, 1], [], []>} : vector<256x128xbf16>, vector<128x128xbf16>, vector<256x128xf32> -> vector<256x128xf32>
    %c0_14 = arith.constant 0 : index
    %c0_15 = arith.constant 0 : index
    %17 = vector.load %arg7[%c0_14, %c0_15] : memref<1x128xf32, #tpu.memory_space<vmem>>, vector<1x128xf32>
    %18 = vector.broadcast %17 : vector<1x128xf32> to vector<256x128xf32>
    %19 = arith.addf %16, %18 : vector<256x128xf32>
    %cst_16 = arith.constant 0.000000e+00 : f32
    %20 = vector.broadcast %cst_16 : f32 to vector<256x128xf32>
    %21 = arith.maximumf %19, %20 : vector<256x128xf32>
    %22 = arith.truncf %21 : vector<256x128xf32> to vector<256x128xbf16>
    %c0_17 = arith.constant 0 : index
    %c0_18 = arith.constant 0 : index
    %23 = vector.load %arg8[%c0_17, %c0_18] : memref<128x128xbf16, #tpu.memory_space<vmem>>, vector<128x128xbf16>
    %cst_19 = arith.constant dense<0.000000e+00> : vector<256x128xf32>
    %24 = tpu.matmul %22, %23, %cst_19 {dimension_numbers = #tpu.dot_dimension_numbers<[1], [0], [0], [1], [0, 0, 1, 1], [], []>} : vector<256x128xbf16>, vector<128x128xbf16>, vector<256x128xf32> -> vector<256x128xf32>
    %c0_20 = arith.constant 0 : index
    %c0_21 = arith.constant 0 : index
    %25 = vector.load %arg9[%c0_20, %c0_21] : memref<1x128xf32, #tpu.memory_space<vmem>>, vector<1x128xf32>
    %26 = vector.broadcast %25 : vector<1x128xf32> to vector<256x128xf32>
    %27 = arith.addf %24, %26 : vector<256x128xf32>
    %28 = arith.negf %27 : vector<256x128xf32>
    %29 = math.exp %28 : vector<256x128xf32>
    %cst_22 = arith.constant 1.000000e+00 : f32
    %30 = vector.broadcast %cst_22 : f32 to vector<256x128xf32>
    %31 = arith.addf %30, %29 : vector<256x128xf32>
    %32 = arith.divf %30, %31 : vector<256x128xf32>
    %33 = arith.truncf %32 : vector<256x128xf32> to vector<256x128xbf16>
    %c0_23 = arith.constant 0 : index
    %c0_24 = arith.constant 0 : index
    %34 = vector.load %arg10[%c0_23, %c0_24] : memref<256x128xbf16, #tpu.memory_space<vmem>>, vector<256x128xbf16>
    tpu.vector_store %arg10[%c0_23, %c0_24], %33 {strides = array<i32>} : memref<256x128xbf16, #tpu.memory_space<vmem>>, vector<256x128xbf16>,
    return
  }
  func.func @transform_0(%arg0: i32) -> (i32, i32) {
    %c0_i32 = arith.constant 0 : i32
    %c0_i32_0 = arith.constant 0 : i32
    return %arg0, %c0_i32 : i32, i32
  }
  func.func @transform_1(%arg0: i32) -> (i32, i32) {
    %c0_i32 = arith.constant 0 : i32
    %c0_i32_0 = arith.constant 0 : i32
    %c0_i32_1 = arith.constant 0 : i32
    return %c0_i32, %c0_i32_0 : i32, i32
  }
  func.func @transform_2(%arg0: i32) -> (i32, i32) {
    %c0_i32 = arith.constant 0 : i32
    %c0_i32_0 = arith.constant 0 : i32
    %c0_i32_1 = arith.constant 0 : i32
    return %c0_i32, %c0_i32_0 : i32, i32
  }
  func.func @transform_3(%arg0: i32) -> (i32, i32) {
    %c0_i32 = arith.constant 0 : i32
    %c0_i32_0 = arith.constant 0 : i32
    %c0_i32_1 = arith.constant 0 : i32
    return %c0_i32, %c0_i32_0 : i32, i32
  }
  func.func @transform_4(%arg0: i32) -> (i32, i32) {
    %c0_i32 = arith.constant 0 : i32
    %c0_i32_0 = arith.constant 0 : i32
    %c0_i32_1 = arith.constant 0 : i32
    return %c0_i32, %c0_i32_0 : i32, i32
  }
  func.func @transform_5(%arg0: i32) -> (i32, i32) {
    %c0_i32 = arith.constant 0 : i32
    %c0_i32_0 = arith.constant 0 : i32
    %c0_i32_1 = arith.constant 0 : i32
    return %c0_i32, %c0_i32_0 : i32, i32
  }
  func.func @transform_6(%arg0: i32) -> (i32, i32) {
    %c0_i32 = arith.constant 0 : i32
    %c0_i32_0 = arith.constant 0 : i32
    %c0_i32_1 = arith.constant 0 : i32
    return %c0_i32, %c0_i32_0 : i32, i32
  }
  func.func @transform_7(%arg0: i32) -> (i32, i32) {
    %c0_i32 = arith.constant 0 : i32
    %c0_i32_0 = arith.constant 0 : i32
    %c0_i32_1 = arith.constant 0 : i32
    return %c0_i32, %c0_i32_0 : i32, i32
  }
  func.func @transform_8(%arg0: i32) -> (i32, i32) {
    %c0_i32 = arith.constant 0 : i32
    %c0_i32_0 = arith.constant 0 : i32
    %c0_i32_1 = arith.constant 0 : i32
    return %c0_i32, %c0_i32_0 : i32, i32
  }
  func.func @transform_9(%arg0: i32) -> (i32, i32) {
    %c0_i32 = arith.constant 0 : i32
    %c0_i32_0 = arith.constant 0 : i32
    return %arg0, %c0_i32 : i32, i32
  }
}

</mosaic_0001>

<llo_original>
// kernel: tpu_custom_call.1
$region0: #{tpu_custom_call.1}
  #allocation0 [shape = 'u32[]', space=smem, size = 0x4, offset = 0x4, fixed_abs, tag = 'smem constant byte address 0x4 - core index']
  #allocation1 [shape = 'u32[144,128]{1,0:T(1,128)}', space=vmem, size = 0x12000, scoped, tag = 'internal scratch']
  %s0 = inlined_call_operand.hbm [shape: bf16[512,128], index: 0, kind: input, shape index: {}]
  %s1 = inlined_call_operand.hbm [shape: bf16[128,128], index: 1, kind: input, shape index: {}]
  %s2 = inlined_call_operand.vmem [shape: f32[1,128], index: 2, kind: input, shape index: {}]
  %s3 = inlined_call_operand.hbm [shape: bf16[128,128], index: 3, kind: input, shape index: {}]
  %s4 = inlined_call_operand.vmem [shape: f32[1,128], index: 4, kind: input, shape index: {}]
  %s5 = inlined_call_operand.hbm [shape: bf16[128,128], index: 5, kind: input, shape index: {}]
  %s6 = inlined_call_operand.vmem [shape: f32[1,128], index: 6, kind: input, shape index: {}]
  %s7 = inlined_call_operand.hbm [shape: bf16[128,128], index: 7, kind: input, shape index: {}]
  %s8 = inlined_call_operand.vmem [shape: f32[1,128], index: 8, kind: input, shape index: {}]
  %s9 = inlined_call_operand.hbm [shape: bf16[512,128], index: 9, kind: output, shape index: {}]
  %s10 = sld [smem:[#allocation0]]
  $region89: #{tpu_custom_call.1} parent=0
    _
  %s12 = ssub.s32 1, %s10
  %s13 = scalar_select 0, %s12, %s10
  $region1: #{tpu_custom_call.1} parent=0
    #allocation2 [shape = 'u8[131072]{0}', space=vmem, size = 0x20000, scoped, tag = 'input window, operand 0']
    #allocation3 [shape = 's32[2]{0}', space=sflag, size = 0x8, scoped, tag = 'scoped memory for tpu_custom_call.1']
    #allocation4 [shape = 's32[2]{0}', space=sflag, size = 0x8, scoped, tag = 'scoped memory for tpu_custom_call.1']
    #allocation5 [shape = 'u8[32768]{0}', space=vmem, size = 0x8000, scoped, tag = 'input window, operand 1, single buffered']
    #allocation6 [shape = 's32[1]{0}', space=sflag, size = 0x4, scoped, tag = 'scoped memory for tpu_custom_call.1']
    #allocation7 [shape = 'u8[32768]{0}', space=vmem, size = 0x8000, scoped, tag = 'input window, operand 3, single buffered']
    #allocation8 [shape = 'u8[32768]{0}', space=vmem, size = 0x8000, scoped, tag = 'input window, operand 5, single buffered']
    #allocation9 [shape = 's32[1]{0}', space=sflag, size = 0x4, scoped, tag = 'scoped memory for tpu_custom_call.1']
    #allocation10 [shape = 'u8[32768]{0}', space=vmem, size = 0x8000, scoped, tag = 'input window, operand 7, single buffered']
    #allocation11 [shape = 'u8[131072]{0}', space=vmem, size = 0x20000, scoped, tag = 'output window, operand 0']
    %14 = vsyncpa [#allocation3], 0
    %s15 = scalar_lea.sflag [#allocation3], 1
    %16 = vsyncpa %s15, 0
    %17 = vsyncpa [#allocation6], 0
    %18 = vsyncpa [#allocation9], 0
    %19 = vsyncpa [#allocation4], 0
    %s20 = scalar_lea.sflag [#allocation4], 1
    %21 = vsyncpa %s20, 0
    loop: start=0, step=1, limit=4
    $region2: #{tpu_custom_call.1} parent=1 // loop_pre_header
      _
    $region3: #{tpu_custom_call.1} parent=1 // loop_header
      %s23 = sphi 0, %s27
      %p24 = scmp.ge.s32.totalorder %s23, 4
      %s33 = sphi 0, %s35
      %s36 = sphi 0, %s33
      %s37 = sphi 0, %s36
      %s53 = sphi 0, %s37
      %s57 = sphi 0, %s57
      %s59 = sphi 0, %s57
      %s60 = sphi 0, %s59
      %s74 = sphi 0, %s60
      %s78 = sphi 0, %s78
      %s80 = sphi 0, %s78
      %s81 = sphi 0, %s80
      %s95 = sphi 0, %s81
      %s99 = sphi 0, %s99
      %s101 = sphi 0, %s99
      %s102 = sphi 0, %s101
      %s116 = sphi 0, %s102
      %s120 = sphi 0, %s120
      %s122 = sphi 0, %s120
      %s123 = sphi 0, %s122
      %s137 = sphi 0, %s123
      %s141 = sphi 0, %s141
      %s143 = sphi 0, %s141
      %s144 = sphi 0, %s143
      %s158 = sphi 0, %s144
      %s162 = sphi 0, %s162
      %s164 = sphi 0, %s162
      %s165 = sphi 0, %s164
      %s179 = sphi 0, %s165
      %s183 = sphi 0, %s183
      %s185 = sphi 0, %s183
      %s186 = sphi 0, %s185
      %s200 = sphi 0, %s186
      %s204 = sphi 0, %s204
      %s206 = sphi 0, %s204
      %s207 = sphi 0, %s206
      %s221 = sphi 0, %s207
      %s227 = sphi 0, %s229
      %s230 = sphi 0, %s227
      %s231 = sphi 0, %s230
      %s247 = sphi 0, %s231
    $region4: #{tpu_custom_call.1} parent=1 // loop_header_branch
      %26 = sbr.rel (%p24) target = $region8
    $region5: #{tpu_custom_call.1} parent=1 // loop_body
      %s28 = ssub.s32 %s23, 1
      %s29 = ssub.s32 %s23, 2
      %s30 = sadd.s32 %s23, 1
      %s31 = ssub.s32 %s23, %s30
      %p32 = scmp.eq.s32.totalorder %s31, 0
      %s34 = sadd.s32 %s33, 1
      %s35 = scalar_select %p32, %s33, %s34
      %p38 = pneg %p32
      %p39 = scmp.eq.s32.totalorder %s23, 1
      %p40 = por %p38, %p39
      %p41 = scmp.ne.s32.totalorder %s33, %s36
      %p42 = scmp.eq.s32.totalorder %s23, 0
      %p43 = por %p41, %p42
      %p44 = scmp.ne.s32.totalorder %s33, %s36
      %p45 = scmp.eq.s32.totalorder %s28, 1
      %p46 = por %p44, %p45
      %p47 = scmp.ne.s32.totalorder %s36, %s37
      %p48 = scmp.eq.s32.totalorder %s28, 0
      %p49 = por %p47, %p48
      %p50 = scmp.ne.s32.totalorder %s36, %s37
      %p51 = scmp.eq.s32.totalorder %s29, 1
      %p52 = por %p50, %p51
      %p54 = scmp.ne.s32.totalorder %s37, %s53
      %p55 = scmp.eq.s32.totalorder %s29, 0
      %p56 = por %p54, %p55
      %s58 = sadd.s32 %s57, 1
      %p61 = scmp.eq.s32.totalorder %s23, 1
      %p62 = scmp.ne.s32.totalorder %s57, %s59
      %p63 = scmp.eq.s32.totalorder %s23, 0
      %p64 = por %p62, %p63
      %p65 = scmp.ne.s32.totalorder %s57, %s59
      %p66 = scmp.eq.s32.totalorder %s28, 1
      %p67 = por %p65, %p66
      %p68 = scmp.ne.s32.totalorder %s59, %s60
      %p69 = scmp.eq.s32.totalorder %s28, 0
      %p70 = por %p68, %p69
      %p71 = scmp.ne.s32.totalorder %s59, %s60
      %p72 = scmp.eq.s32.totalorder %s29, 1
      %p73 = por %p71, %p72
      %p75 = scmp.ne.s32.totalorder %s60, %s74
      %p76 = scmp.eq.s32.totalorder %s29, 0
      %p77 = por %p75, %p76
      %s79 = sadd.s32 %s78, 1
      %p82 = scmp.eq.s32.totalorder %s23, 1
      %p83 = scmp.ne.s32.totalorder %s78, %s80
      %p84 = scmp.eq.s32.totalorder %s23, 0
      %p85 = por %p83, %p84
      %p86 = scmp.ne.s32.totalorder %s78, %s80
      %p87 = scmp.eq.s32.totalorder %s28, 1
      %p88 = por %p86, %p87
      %p89 = scmp.ne.s32.totalorder %s80, %s81
      %p90 = scmp.eq.s32.totalorder %s28, 0
      %p91 = por %p89, %p90
      %p92 = scmp.ne.s32.totalorder %s80, %s81
      %p93 = scmp.eq.s32.totalorder %s29, 1
      %p94 = por %p92, %p93
      %p96 = scmp.ne.s32.totalorder %s81, %s95
      %p97 = scmp.eq.s32.totalorder %s29, 0
      %p98 = por %p96, %p97
      %s100 = sadd.s32 %s99, 1
      %p103 = scmp.eq.s32.totalorder %s23, 1
      %p104 = scmp.ne.s32.totalorder %s99, %s101
      %p105 = scmp.eq.s32.totalorder %s23, 0
      %p106 = por %p104, %p105
      %p107 = scmp.ne.s32.totalorder %s99, %s101
      %p108 = scmp.eq.s32.totalorder %s28, 1
      %p109 = por %p107, %p108
      %p110 = scmp.ne.s32.totalorder %s101, %s102
      %p111 = scmp.eq.s32.totalorder %s28, 0
      %p112 = por %p110, %p111
      %p113 = scmp.ne.s32.totalorder %s101, %s102
      %p114 = scmp.eq.s32.totalorder %s29, 1
      %p115 = por %p113, %p114
      %p117 = scmp.ne.s32.totalorder %s102, %s116
      %p118 = scmp.eq.s32.totalorder %s29, 0
      %p119 = por %p117, %p118
      %s121 = sadd.s32 %s120, 1
      %p124 = scmp.eq.s32.totalorder %s23, 1
      %p125 = scmp.ne.s32.totalorder %s120, %s122
      %p126 = scmp.eq.s32.totalorder %s23, 0
      %p127 = por %p125, %p126
      %p128 = scmp.ne.s32.totalorder %s120, %s122
      %p129 = scmp.eq.s32.totalorder %s28, 1
      %p130 = por %p128, %p129
      %p131 = scmp.ne.s32.totalorder %s122, %s123
      %p132 = scmp.eq.s32.totalorder %s28, 0
      %p133 = por %p131, %p132
      %p134 = scmp.ne.s32.totalorder %s122, %s123
      %p135 = scmp.eq.s32.totalorder %s29, 1
      %p136 = por %p134, %p135
      %p138 = scmp.ne.s32.totalorder %s123, %s137
      %p139 = scmp.eq.s32.totalorder %s29, 0
      %p140 = por %p138, %p139
      %s142 = sadd.s32 %s141, 1
      %p145 = scmp.eq.s32.totalorder %s23, 1
      %p146 = scmp.ne.s32.totalorder %s141, %s143
      %p147 = scmp.eq.s32.totalorder %s23, 0
      %p148 = por %p146, %p147
      %p149 = scmp.ne.s32.totalorder %s141, %s143
      %p150 = scmp.eq.s32.totalorder %s28, 1
      %p151 = por %p149, %p150
      %p152 = scmp.ne.s32.totalorder %s143, %s144
      %p153 = scmp.eq.s32.totalorder %s28, 0
      %p154 = por %p152, %p153
      %p155 = scmp.ne.s32.totalorder %s143, %s144
      %p156 = scmp.eq.s32.totalorder %s29, 1
      %p157 = por %p155, %p156
      %p159 = scmp.ne.s32.totalorder %s144, %s158
      %p160 = scmp.eq.s32.totalorder %s29, 0
      %p161 = por %p159, %p160
      %s163 = sadd.s32 %s162, 1
      %p166 = scmp.eq.s32.totalorder %s23, 1
      %p167 = scmp.ne.s32.totalorder %s162, %s164
      %p168 = scmp.eq.s32.totalorder %s23, 0
      %p169 = por %p167, %p168
      %p170 = scmp.ne.s32.totalorder %s162, %s164
      %p171 = scmp.eq.s32.totalorder %s28, 1
      %p172 = por %p170, %p171
      %p173 = scmp.ne.s32.totalorder %s164, %s165
      %p174 = scmp.eq.s32.totalorder %s28, 0
      %p175 = por %p173, %p174
      %p176 = scmp.ne.s32.totalorder %s164, %s165
      %p177 = scmp.eq.s32.totalorder %s29, 1
      %p178 = por %p176, %p177
      %p180 = scmp.ne.s32.totalorder %s165, %s179
      %p181 = scmp.eq.s32.totalorder %s29, 0
      %p182 = por %p180, %p181
      %s184 = sadd.s32 %s183, 1
      %p187 = scmp.eq.s32.totalorder %s23, 1
      %p188 = scmp.ne.s32.totalorder %s183, %s185
      %p189 = scmp.eq.s32.totalorder %s23, 0
      %p190 = por %p188, %p189
      %p191 = scmp.ne.s32.totalorder %s183, %s185
      %p192 = scmp.eq.s32.totalorder %s28, 1
      %p193 = por %p191, %p192
      %p194 = scmp.ne.s32.totalorder %s185, %s186
      %p195 = scmp.eq.s32.totalorder %s28, 0
      %p196 = por %p194, %p195
      %p197 = scmp.ne.s32.totalorder %s185, %s186
      %p198 = scmp.eq.s32.totalorder %s29, 1
      %p199 = por %p197, %p198
      %p201 = scmp.ne.s32.totalorder %s186, %s200
      %p202 = scmp.eq.s32.totalorder %s29, 0
      %p203 = por %p201, %p202
      %s205 = sadd.s32 %s204, 1
      %p208 = scmp.eq.s32.totalorder %s23, 1
      %p209 = scmp.ne.s32.totalorder %s204, %s206
      %p210 = scmp.eq.s32.totalorder %s23, 0
      %p211 = por %p209, %p210
      %p212 = scmp.ne.s32.totalorder %s204, %s206
      %p213 = scmp.eq.s32.totalorder %s28, 1
      %p214 = por %p212, %p213
      %p215 = scmp.ne.s32.totalorder %s206, %s207
      %p216 = scmp.eq.s32.totalorder %s28, 0
      %p217 = por %p215, %p216
      %p218 = scmp.ne.s32.totalorder %s206, %s207
      %p219 = scmp.eq.s32.totalorder %s29, 1
      %p220 = por %p218, %p219
      %p222 = scmp.ne.s32.totalorder %s207, %s221
      %p223 = scmp.eq.s32.totalorder %s29, 0
      %p224 = por %p222, %p223
      %s225 = ssub.s32 %s23, %s30
      %p226 = scmp.eq.s32.totalorder %s225, 0
      %s228 = sadd.s32 %s227, 1
      %s229 = scalar_select %p226, %s227, %s228
      %p232 = pneg %p226
      %p233 = scmp.eq.s32.totalorder %s23, 1
      %p234 = por %p232, %p233
      %p235 = scmp.ne.s32.totalorder %s227, %s230
      %p236 = scmp.eq.s32.totalorder %s23, 0
      %p237 = por %p235, %p236
      %p238 = scmp.ne.s32.totalorder %s227, %s230
      %p239 = scmp.eq.s32.totalorder %s28, 1
      %p240 = por %p238, %p239
      %p241 = scmp.ne.s32.totalorder %s230, %s231
      %p242 = scmp.eq.s32.totalorder %s28, 0
      %p243 = por %p241, %p242
      %p244 = scmp.ne.s32.totalorder %s230, %s231
      %p245 = scmp.eq.s32.totalorder %s29, 1
      %p246 = por %p244, %p245
      %p248 = scmp.ne.s32.totalorder %s231, %s247
      %p249 = scmp.eq.s32.totalorder %s29, 0
      %p250 = por %p248, %p249
      %p251 = scmp.le.s32.totalorder 1, %s23
      %p252 = scmp.lt.s32.totalorder %s23, 3
      %p253 = pnand %p251, %p252
      %p254 = pneg %p253
      // Predicated region
      $region9: #{tpu_custom_call.1} parent=5 // pred_check
        _
      $region10: #{tpu_custom_call.1} parent=5 // pred_check_branch
        %256 = sbr.rel (%p253) target = $region12
      $region11: #{tpu_custom_call.1} parent=5 // pred_region
        %s257 = ssub.s32 %s23, 1
        // Predicated region
        $region13: #{tpu_custom_call.1} parent=11 // pred_check
          %p258 = pneg %p70
        $region14: #{tpu_custom_call.1} parent=11 // pred_check_branch
          %260 = sbr.rel (%p258) target = $region16
        $region15: #{tpu_custom_call.1} parent=11 // pred_region
          %s262 = ssub.s32 1024, 1024
          %263 = vsyncadd [#allocation6], %s262
          %s264 = sshll.u32 [#allocation5], 4
          %s265 = int_to_ptr.vmem [resolvable:$true] %s264
          %270 = dma.hbm_to_vmem [thread:$0]  %s1, 1024, %s265, [#allocation6], 64, 64, 4
        $region16: #{tpu_custom_call.1} parent=11 // pred_fallthru
          _
        // Predicated region
        $region17: #{tpu_custom_call.1} parent=11 // pred_check
          %p271 = pneg %p91
        $region18: #{tpu_custom_call.1} parent=11 // pred_check_branch
          %273 = sbr.rel (%p271) target = $region20
        $region19: #{tpu_custom_call.1} parent=11 // pred_region
          _
        $region20: #{tpu_custom_call.1} parent=11 // pred_fallthru
          _
        // Predicated region
        $region21: #{tpu_custom_call.1} parent=11 // pred_check
          %p274 = pneg %p112
        $region22: #{tpu_custom_call.1} parent=11 // pred_check_branch
          %276 = sbr.rel (%p274) target = $region24
        $region23: #{tpu_custom_call.1} parent=11 // pred_region
          %s278 = ssub.s32 1024, 1024
          %279 = vsyncadd [#allocation6], %s278
          %s280 = sshll.u32 [#allocation7], 4
          %s281 = int_to_ptr.vmem [resolvable:$true] %s280
          %286 = dma.hbm_to_vmem [thread:$0]  %s3, 1024, %s281, [#allocation6], 64, 64, 4
        $region24: #{tpu_custom_call.1} parent=11 // pred_fallthru
          _
        // Predicated region
        $region25: #{tpu_custom_call.1} parent=11 // pred_check
          %p287 = pneg %p133
        $region26: #{tpu_custom_call.1} parent=11 // pred_check_branch
          %289 = sbr.rel (%p287) target = $region28
        $region27: #{tpu_custom_call.1} parent=11 // pred_region
          _
        $region28: #{tpu_custom_call.1} parent=11 // pred_fallthru
          _
        // Predicated region
        $region29: #{tpu_custom_call.1} parent=11 // pred_check
          %p290 = pneg %p154
        $region30: #{tpu_custom_call.1} parent=11 // pred_check_branch
          %292 = sbr.rel (%p290) target = $region32
        $region31: #{tpu_custom_call.1} parent=11 // pred_region
          %s294 = ssub.s32 1024, 1024
          %295 = vsyncadd [#allocation9], %s294
          %s296 = sshll.u32 [#allocation8], 4
          %s297 = int_to_ptr.vmem [resolvable:$true] %s296
          %302 = dma.hbm_to_vmem [thread:$0]  %s5, 1024, %s297, [#allocation9], 64, 64, 4
        $region32: #{tpu_custom_call.1} parent=11 // pred_fallthru
          _
        // Predicated region
        $region33: #{tpu_custom_call.1} parent=11 // pred_check
          %p303 = pneg %p175
        $region34: #{tpu_custom_call.1} parent=11 // pred_check_branch
          %305 = sbr.rel (%p303) target = $region36
        $region35: #{tpu_custom_call.1} parent=11 // pred_region
          _
        $region36: #{tpu_custom_call.1} parent=11 // pred_fallthru
          _
        // Predicated region
        $region37: #{tpu_custom_call.1} parent=11 // pred_check
          %p306 = pneg %p196
        $region38: #{tpu_custom_call.1} parent=11 // pred_check_branch
          %308 = sbr.rel (%p306) target = $region40
        $region39: #{tpu_custom_call.1} parent=11 // pred_region
          %s310 = ssub.s32 1024, 1024
          %311 = vsyncadd [#allocation9], %s310
          %s312 = sshll.u32 [#allocation10], 4
          %s313 = int_to_ptr.vmem [resolvable:$true] %s312
          %318 = dma.hbm_to_vmem [thread:$0]  %s7, 1024, %s313, [#allocation9], 64, 64, 4
        $region40: #{tpu_custom_call.1} parent=11 // pred_fallthru
          _
        // Predicated region
        $region41: #{tpu_custom_call.1} parent=11 // pred_check
          %p319 = pneg %p217
        $region42: #{tpu_custom_call.1} parent=11 // pred_check_branch
          %321 = sbr.rel (%p319) target = $region44
        $region43: #{tpu_custom_call.1} parent=11 // pred_region
          _
        $region44: #{tpu_custom_call.1} parent=11 // pred_fallthru
          _
      $region12: #{tpu_custom_call.1} parent=5 // pred_fallthru
        _
      %p322 = scmp.lt.s32.totalorder %s23, 2
      // Predicated region
      $region45: #{tpu_custom_call.1} parent=5 // pred_check
        %p323 = pneg %p322
      $region46: #{tpu_custom_call.1} parent=5 // pred_check_branch
        %325 = sbr.rel (%p323) target = $region48
      $region47: #{tpu_custom_call.1} parent=5 // pred_region
        // Predicated region
        $region49: #{tpu_custom_call.1} parent=47 // pred_check
          %p326 = pneg %p43
        $region50: #{tpu_custom_call.1} parent=47 // pred_check_branch
          %328 = sbr.rel (%p326) target = $region52
        $region51: #{tpu_custom_call.1} parent=47 // pred_region
          %s329 = sand.u32 %s33, 1
          %s330 = scalar_lea.sflag [#allocation3], %s329
          %s331 = sand.u32 %s33, 1
          %s332 = smul.addr %s331, 128
          %s333 = scalar_lea.vmem [#allocation2], %s332
          %s334 = smul.u32 32, %s23
          %s336 = ssub.s32 2048, 2048
          %337 = vsyncadd %s330, %s336
          %s338 = smul.addr %s334, 64
          %s339 = scalar_lea.hbm %s0, %s338
          %s340 = sshll.u32 %s333, 4
          %s341 = int_to_ptr.vmem [resolvable:$true] %s340
          %346 = dma.hbm_to_vmem [thread:$0]  %s339, 2048, %s341, %s330, 64, 64, 4
        $region52: #{tpu_custom_call.1} parent=47 // pred_fallthru
          _
      $region48: #{tpu_custom_call.1} parent=5 // pred_fallthru
        _
      %p347 = scmp.le.s32.totalorder 1, %s23
      %p348 = scmp.lt.s32.totalorder %s23, 3
      %p349 = pnand %p347, %p348
      %p350 = pneg %p349
      // Predicated region
      $region53: #{tpu_custom_call.1} parent=5 // pred_check
        _
      $region54: #{tpu_custom_call.1} parent=5 // pred_check_branch
        %352 = sbr.rel (%p349) target = $region56
      $region55: #{tpu_custom_call.1} parent=5 // pred_region
        %s353 = ssub.s32 %s23, 1
        %s354 = sand.u32 %s36, 1
        %s355 = scalar_lea.sflag [#allocation3], %s354
        %s356 = sand.u32 %s36, 1
        %s357 = smul.addr %s356, 128
        %s358 = scalar_lea.vmem [#allocation2], %s357
        // Predicated region
        $region57: #{tpu_custom_call.1} parent=55 // pred_check
          %p359 = pneg %p49
        $region58: #{tpu_custom_call.1} parent=55 // pred_check_branch
          %361 = sbr.rel (%p359) target = $region60
        $region59: #{tpu_custom_call.1} parent=55 // pred_region
          %362 = dma.done %s355, 2048
        $region60: #{tpu_custom_call.1} parent=55 // pred_fallthru
          _
        // Predicated region
        $region61: #{tpu_custom_call.1} parent=55 // pred_check
          %p363 = pneg %p70
        $region62: #{tpu_custom_call.1} parent=55 // pred_check_branch
          %365 = sbr.rel (%p363) target = $region64
        $region63: #{tpu_custom_call.1} parent=55 // pred_region
          %366 = dma.done [#allocation6], 1024
        $region64: #{tpu_custom_call.1} parent=55 // pred_fallthru
          _
        // Predicated region
        $region65: #{tpu_custom_call.1} parent=55 // pred_check
          %p367 = pneg %p112
        $region66: #{tpu_custom_call.1} parent=55 // pred_check_branch
          %369 = sbr.rel (%p367) target = $region68
        $region67: #{tpu_custom_call.1} parent=55 // pred_region
          %370 = dma.done [#allocation6], 1024
        $region68: #{tpu_custom_call.1} parent=55 // pred_fallthru
          _
        // Predicated region
        $region69: #{tpu_custom_call.1} parent=55 // pred_check
          %p371 = pneg %p154
        $region70: #{tpu_custom_call.1} parent=55 // pred_check_branch
          %373 = sbr.rel (%p371) target = $region72
        $region71: #{tpu_custom_call.1} parent=55 // pred_region
          %374 = dma.done [#allocation9], 1024
        $region72: #{tpu_custom_call.1} parent=55 // pred_fallthru
          _
        // Predicated region
        $region73: #{tpu_custom_call.1} parent=55 // pred_check
          %p375 = pneg %p196
        $region74: #{tpu_custom_call.1} parent=55 // pred_check_branch
          %377 = sbr.rel (%p375) target = $region76
        $region75: #{tpu_custom_call.1} parent=55 // pred_region
          %378 = dma.done [#allocation9], 1024
        $region76: #{tpu_custom_call.1} parent=55 // pred_fallthru
          _
        %s379 = sand.u32 %s36, 1
        %s380 = scalar_lea.sflag [#allocation3], %s379
        %s381 = sand.u32 %s36, 1
        %s382 = smul.addr %s381, 128
        %s383 = scalar_lea.vmem [#allocation2], %s382
        %p384 = pneg %p49
        %p385 = pneg %p46
        %p386 = pneg %p70
        %p387 = pneg %p67
        %p388 = pneg %p91
        %p389 = pneg %p88
        %p390 = pneg %p112
        %p391 = pneg %p109
        %p392 = pneg %p133
        %p393 = pneg %p130
        %p394 = pneg %p154
        %p395 = pneg %p151
        %p396 = pneg %p175
        %p397 = pneg %p172
        %p398 = pneg %p196
        %p399 = pneg %p193
        %p400 = pneg %p217
        %p401 = pneg %p214
        %p402 = pneg %p243
        %p403 = pneg %p240
        %s404 = sand.u32 %s230, 1
        %s405 = scalar_lea.sflag [#allocation4], %s404
        %s406 = sand.u32 %s230, 1
        %s407 = smul.addr %s406, 128
        %s408 = scalar_lea.vmem [#allocation11], %s407
        %s409 = smul.u32 32, %s28
        %s410 = smul.u32 32, %s28
        %v412 = vld [vmem:[%s358] sm:$0xf]
        %v413 = vld [vmem:[%s358 + $0x4] sm:$0xf]
        %v414 = vld [vmem:[%s358 + $0x8] sm:$0xf]
        %v415 = vld [vmem:[%s358 + $0xc] sm:$0xf]
        %v416 = vld [vmem:[%s358 + $0x10] sm:$0xf]
        %v417 = vld [vmem:[%s358 + $0x14] sm:$0xf]
        %v418 = vld [vmem:[%s358 + $0x18] sm:$0xf]
        %v419 = vld [vmem:[%s358 + $0x1c] sm:$0xf]
        %v420 = vld [vmem:[%s358 + $0x20] sm:$0xf]
        %v421 = vld [vmem:[%s358 + $0x24] sm:$0xf]
        %v422 = vld [vmem:[%s358 + $0x28] sm:$0xf]
        %v423 = vld [vmem:[%s358 + $0x2c] sm:$0xf]
        %v424 = vld [vmem:[%s358 + $0x30] sm:$0xf]
        %v425 = vld [vmem:[%s358 + $0x34] sm:$0xf]
        %v426 = vld [vmem:[%s358 + $0x38] sm:$0xf]
        %v427 = vld [vmem:[%s358 + $0x3c] sm:$0xf]
        %v428 = vld [vmem:[%s358 + $0x40] sm:$0xf]
        %v429 = vld [vmem:[%s358 + $0x44] sm:$0xf]
        %v430 = vld [vmem:[%s358 + $0x48] sm:$0xf]
        %v431 = vld [vmem:[%s358 + $0x4c] sm:$0xf]
        %v432 = vld [vmem:[%s358 + $0x50] sm:$0xf]
        %v433 = vld [vmem:[%s358 + $0x54] sm:$0xf]
        %v434 = vld [vmem:[%s358 + $0x58] sm:$0xf]
        %v435 = vld [vmem:[%s358 + $0x5c] sm:$0xf]
        %v436 = vld [vmem:[%s358 + $0x60] sm:$0xf]
        %v437 = vld [vmem:[%s358 + $0x64] sm:$0xf]
        %v438 = vld [vmem:[%s358 + $0x68] sm:$0xf]
        %v439 = vld [vmem:[%s358 + $0x6c] sm:$0xf]
        %v440 = vld [vmem:[%s358 + $0x70] sm:$0xf]
        %v441 = vld [vmem:[%s358 + $0x74] sm:$0xf]
        %v442 = vld [vmem:[%s358 + $0x78] sm:$0xf]
        %v443 = vld [vmem:[%s358 + $0x7c] sm:$0xf]
        %v444 = vld [vmem:[#allocation5] sm:$0xf]
        %v445 = vld [vmem:[#allocation5 + $0x4] sm:$0xf]
        %v446 = vld [vmem:[#allocation5 + $0x8] sm:$0xf]
        %v447 = vld [vmem:[#allocation5 + $0xc] sm:$0xf]
        %v448 = vld [vmem:[#allocation5 + $0x10] sm:$0xf]
        %v449 = vld [vmem:[#allocation5 + $0x14] sm:$0xf]
        %v450 = vld [vmem:[#allocation5 + $0x18] sm:$0xf]
        %v451 = vld [vmem:[#allocation5 + $0x1c] sm:$0xf]
        %v452 = vld [vmem:[#allocation5 + $0x20] sm:$0xf]
        %v453 = vld [vmem:[#allocation5 + $0x24] sm:$0xf]
        %v454 = vld [vmem:[#allocation5 + $0x28] sm:$0xf]
        %v455 = vld [vmem:[#allocation5 + $0x2c] sm:$0xf]
        %v456 = vld [vmem:[#allocation5 + $0x30] sm:$0xf]
        %v457 = vld [vmem:[#allocation5 + $0x34] sm:$0xf]
        %v458 = vld [vmem:[#allocation5 + $0x38] sm:$0xf]
        %v459 = vld [vmem:[#allocation5 + $0x3c] sm:$0xf]
        %v460 = vld [vmem:[%s2] sm:$0x1]
        %v462 = vlaneseq
        %v463 = vshrl.u32 %v462, 7
        %v464 = vsub.s32 0, %v463
        %v465 = vrot.slane %v460, %v464
        %v499 = vunpack.c.l.b16 %v412
        %v500 = vunpack.c.l.b16 %v413
        %v501 = vunpack.c.l.b16 %v414
        %v502 = vunpack.c.l.b16 %v415
        %v503 = vunpack.c.l.b16 %v416
        %v504 = vunpack.c.l.b16 %v417
        %v505 = vunpack.c.l.b16 %v418
        %v506 = vunpack.c.l.b16 %v419
        %v507 = vunpack.c.l.b16 %v420
        %v508 = vunpack.c.l.b16 %v421
        %v509 = vunpack.c.l.b16 %v422
        %v510 = vunpack.c.l.b16 %v423
        %v511 = vunpack.c.l.b16 %v424
        %v512 = vunpack.c.l.b16 %v425
        %v513 = vunpack.c.l.b16 %v426
        %v514 = vunpack.c.l.b16 %v427
        %v515 = vunpack.c.l.b16 %v428
        %v516 = vunpack.c.l.b16 %v429
        %v517 = vunpack.c.l.b16 %v430
        %v518 = vunpack.c.l.b16 %v431
        %v519 = vunpack.c.l.b16 %v432
        %v520 = vunpack.c.l.b16 %v433
        %v521 = vunpack.c.l.b16 %v434
        %v522 = vunpack.c.l.b16 %v435
        %v523 = vunpack.c.l.b16 %v436
        %v524 = vunpack.c.l.b16 %v437
        %v525 = vunpack.c.l.b16 %v438
        %v526 = vunpack.c.l.b16 %v439
        %v527 = vunpack.c.l.b16 %v440
        %v528 = vunpack.c.l.b16 %v441
        %v529 = vunpack.c.l.b16 %v442
        %v530 = vunpack.c.l.b16 %v443
        %v531 = vpack.c.b16 %v500, %v499
        %v532 = vpack.c.b16 %v502, %v501
        %v533 = vpack.c.b16 %v504, %v503
        %v534 = vpack.c.b16 %v506, %v505
        %v535 = vpack.c.b16 %v508, %v507
        %v536 = vpack.c.b16 %v510, %v509
        %v537 = vpack.c.b16 %v512, %v511
        %v538 = vpack.c.b16 %v514, %v513
        %v539 = vpack.c.b16 %v516, %v515
        %v540 = vpack.c.b16 %v518, %v517
        %v541 = vpack.c.b16 %v520, %v519
        %v542 = vpack.c.b16 %v522, %v521
        %v543 = vpack.c.b16 %v524, %v523
        %v544 = vpack.c.b16 %v526, %v525
        %v545 = vpack.c.b16 %v528, %v527
        %v546 = vpack.c.b16 %v530, %v529
        %v579 = vunpack.c.l.b16 %v444
        %v580 = vunpack.c.l.b16 %v445
        %v581 = vunpack.c.l.b16 %v446
        %v582 = vunpack.c.l.b16 %v447
        %v583 = vunpack.c.l.b16 %v448
        %v584 = vunpack.c.l.b16 %v449
        %v585 = vunpack.c.l.b16 %v450
        %v586 = vunpack.c.l.b16 %v451
        %v587 = vunpack.c.l.b16 %v452
        %v588 = vunpack.c.l.b16 %v453
        %v589 = vunpack.c.l.b16 %v454
        %v590 = vunpack.c.l.b16 %v455
        %v591 = vunpack.c.l.b16 %v456
        %v592 = vunpack.c.l.b16 %v457
        %v593 = vunpack.c.l.b16 %v458
        %v594 = vunpack.c.l.b16 %v459
        %v595 = vpack.c.b16 %v580, %v579
        %v596 = vpack.c.b16 %v582, %v581
        %v597 = vpack.c.b16 %v584, %v583
        %v598 = vpack.c.b16 %v586, %v585
        %v599 = vpack.c.b16 %v588, %v587
        %v600 = vpack.c.b16 %v590, %v589
        %v601 = vpack.c.b16 %v592, %v591
        %v602 = vpack.c.b16 %v594, %v593
        %611 = vmatprep.subr.bf16.mxu0 0
        %612 = vmatpush1.bf16.msra.mxu0 %v602
        %613 = vmatprep.subr.bf16.mxu0 0
        %614 = vmatpush1.bf16.msra.mxu0 %v601
        %615 = vmatprep.subr.bf16.mxu0 0
        %616 = vmatpush1.bf16.msra.mxu0 %v600
        %617 = vmatprep.subr.bf16.mxu0 0
        %618 = vmatpush1.bf16.msra.mxu0 %v599
        %619 = vmatprep.subr.bf16.mxu0 0
        %620 = vmatpush1.bf16.msra.mxu0 %v598
        %621 = vmatprep.subr.bf16.mxu0 0
        %622 = vmatpush1.bf16.msra.mxu0 %v597
        %623 = vmatprep.subr.bf16.mxu0 0
        %624 = vmatpush1.bf16.msra.mxu0 %v596
        %625 = vmatprep.subr.bf16.mxu0 0
        %626 = vmatpush1.bf16.msra.mxu0 %v595
        %627 = vmatprep.subr.bf16.mxu0 0
        %628 = vmatpush2.bf16.msra.mxu0 0
        %629 = vmatprep.subr.bf16.mxu0 0
        %630 = vmatpush2.bf16.msra.mxu0 0
        %631 = vmatprep.subr.bf16.mxu0 0
        %632 = vmatpush2.bf16.msra.mxu0 0
        %633 = vmatprep.subr.bf16.mxu0 0
        %634 = vmatpush2.bf16.msra.mxu0 0
        %635 = vmatprep.subr.bf16.mxu0 0
        %636 = vmatpush2.bf16.msra.mxu0 0
        %637 = vmatprep.subr.bf16.mxu0 0
        %638 = vmatpush2.bf16.msra.mxu0 0
        %639 = vmatprep.subr.bf16.mxu0 0
        %640 = vmatpush2.bf16.msra.mxu0 0
        %641 = vmatprep.subr.bf16.mxu0 0
        %642 = vmatpush2.bf16.msra.mxu0 0
        %643 = vmatprep.mubr.bf16.mxu0 0
        %644 = vmatmul.mubr.bf16.gmra.mxu0 %v531
        %v645 = vpop.f32.mrf.mxu0
        %v646 = vadd.f32 %v465, %v645
        %v647 = vpop.f32.mrf.mxu0
        %v648 = vpop.f32.mrf.mxu0
        %v649 = vadd.f32 %v465, %v648
        %v650 = vpop.f32.mrf.mxu0
        %651 = vmatprep.mubr.bf16.mxu0 0
        %652 = vmatmul.mubr.bf16.gmra.mxu0 %v532
        %v653 = vpop.f32.mrf.mxu0
        %v654 = vadd.f32 %v465, %v653
        %v655 = vpop.f32.mrf.mxu0
        %v656 = vpop.f32.mrf.mxu0
        %v657 = vadd.f32 %v465, %v656
        %v658 = vpop.f32.mrf.mxu0
        %659 = vmatprep.mubr.bf16.mxu0 0
        %660 = vmatmul.mubr.bf16.gmra.mxu0 %v533
        %v661 = vpop.f32.mrf.mxu0
        %v662 = vadd.f32 %v465, %v661
        %v663 = vpop.f32.mrf.mxu0
        %v664 = vpop.f32.mrf.mxu0
        %v665 = vadd.f32 %v465, %v664
        %v666 = vpop.f32.mrf.mxu0
        %667 = vmatprep.mubr.bf16.mxu0 0
        %668 = vmatmul.mubr.bf16.gmra.mxu0 %v534
        %v669 = vpop.f32.mrf.mxu0
        %v670 = vadd.f32 %v465, %v669
        %v671 = vpop.f32.mrf.mxu0
        %v672 = vpop.f32.mrf.mxu0
        %v673 = vadd.f32 %v465, %v672
        %v674 = vpop.f32.mrf.mxu0
        %675 = vmatprep.mubr.bf16.mxu0 0
        %676 = vmatmul.mubr.bf16.gmra.mxu0 %v535
        %v677 = vpop.f32.mrf.mxu0
        %v678 = vadd.f32 %v465, %v677
        %v679 = vpop.f32.mrf.mxu0
        %v680 = vpop.f32.mrf.mxu0
        %v681 = vadd.f32 %v465, %v680
        %v682 = vpop.f32.mrf.mxu0
        %683 = vmatprep.mubr.bf16.mxu0 0
        %684 = vmatmul.mubr.bf16.gmra.mxu0 %v536
        %v685 = vpop.f32.mrf.mxu0
        %v686 = vadd.f32 %v465, %v685
        %v687 = vpop.f32.mrf.mxu0
        %v688 = vpop.f32.mrf.mxu0
        %v689 = vadd.f32 %v465, %v688
        %v690 = vpop.f32.mrf.mxu0
        %691 = vmatprep.mubr.bf16.mxu0 0
        %692 = vmatmul.mubr.bf16.gmra.mxu0 %v537
        %v693 = vpop.f32.mrf.mxu0
        %v694 = vadd.f32 %v465, %v693
        %v695 = vpop.f32.mrf.mxu0
        %v696 = vpop.f32.mrf.mxu0
        %v697 = vadd.f32 %v465, %v696
        %v698 = vpop.f32.mrf.mxu0
        %699 = vmatprep.mubr.bf16.mxu0 0
        %700 = vmatmul.mubr.bf16.gmra.mxu0 %v538
        %v701 = vpop.f32.mrf.mxu0
        %v702 = vadd.f32 %v465, %v701
        %v703 = vpop.f32.mrf.mxu0
        %v704 = vpop.f32.mrf.mxu0
        %v705 = vadd.f32 %v465, %v704
        %v706 = vpop.f32.mrf.mxu0
        %707 = vmatprep.mubr.bf16.mxu0 0
        %708 = vmatmul.mubr.bf16.gmra.mxu0 %v539
        %v709 = vpop.f32.mrf.mxu0
        %v710 = vadd.f32 %v465, %v709
        %v711 = vpop.f32.mrf.mxu0
        %v712 = vpop.f32.mrf.mxu0
        %v713 = vadd.f32 %v465, %v712
        %v714 = vpop.f32.mrf.mxu0
        %715 = vmatprep.mubr.bf16.mxu0 0
        %716 = vmatmul.mubr.bf16.gmra.mxu0 %v540
        %v717 = vpop.f32.mrf.mxu0
        %v718 = vadd.f32 %v465, %v717
        %v719 = vpop.f32.mrf.mxu0
        %v720 = vpop.f32.mrf.mxu0
        %v721 = vadd.f32 %v465, %v720
        %v722 = vpop.f32.mrf.mxu0
        %723 = vmatprep.mubr.bf16.mxu0 0
        %724 = vmatmul.mubr.bf16.gmra.mxu0 %v541
        %v725 = vpop.f32.mrf.mxu0
        %v726 = vadd.f32 %v465, %v725
        %v727 = vpop.f32.mrf.mxu0
        %v728 = vpop.f32.mrf.mxu0
        %v729 = vadd.f32 %v465, %v728
        %v730 = vpop.f32.mrf.mxu0
        %731 = vmatprep.mubr.bf16.mxu0 0
        %732 = vmatmul.mubr.bf16.gmra.mxu0 %v542
        %v733 = vpop.f32.mrf.mxu0
        %v734 = vadd.f32 %v465, %v733
        %v735 = vpop.f32.mrf.mxu0
        %v736 = vpop.f32.mrf.mxu0
        %v737 = vadd.f32 %v465, %v736
        %v738 = vpop.f32.mrf.mxu0
        %739 = vmatprep.mubr.bf16.mxu0 0
        %740 = vmatmul.mubr.bf16.gmra.mxu0 %v543
        %v741 = vpop.f32.mrf.mxu0
        %v742 = vadd.f32 %v465, %v741
        %v743 = vpop.f32.mrf.mxu0
        %v744 = vpop.f32.mrf.mxu0
        %v745 = vadd.f32 %v465, %v744
        %v746 = vpop.f32.mrf.mxu0
        %747 = vmatprep.mubr.bf16.mxu0 0
        %748 = vmatmul.mubr.bf16.gmra.mxu0 %v544
        %v749 = vpop.f32.mrf.mxu0
        %v750 = vadd.f32 %v465, %v749
        %v751 = vpop.f32.mrf.mxu0
        %v752 = vpop.f32.mrf.mxu0
        %v753 = vadd.f32 %v465, %v752
        %v754 = vpop.f32.mrf.mxu0
        %755 = vmatprep.mubr.bf16.mxu0 0
        %756 = vmatmul.mubr.bf16.gmra.mxu0 %v545
        %v757 = vpop.f32.mrf.mxu0
        %v758 = vadd.f32 %v465, %v757
        %v759 = vpop.f32.mrf.mxu0
        %v760 = vpop.f32.mrf.mxu0
        %v761 = vadd.f32 %v465, %v760
        %v762 = vpop.f32.mrf.mxu0
        %763 = vmatprep.mubr.bf16.mxu0 0
        %764 = vmatmul.mubr.bf16.gmra.mxu0 %v546
        %v765 = vpop.f32.mrf.mxu0
        %v766 = vadd.f32 %v465, %v765
        %v767 = vpop.f32.mrf.mxu0
        %v768 = vpop.f32.mrf.mxu0
        %v769 = vadd.f32 %v465, %v768
        %v770 = vpop.f32.mrf.mxu0
        %771 = vdwg.mxu0
        %v772 = vmax.f32 %v646, 0.0
        %v773 = vmax.f32 %v649, 0.0
        %v774 = vmax.f32 %v654, 0.0
        %v775 = vmax.f32 %v657, 0.0
        %v776 = vmax.f32 %v662, 0.0
        %v777 = vmax.f32 %v665, 0.0
        %v778 = vmax.f32 %v670, 0.0
        %v779 = vmax.f32 %v673, 0.0
        %v780 = vmax.f32 %v678, 0.0
        %v781 = vmax.f32 %v681, 0.0
        %v782 = vmax.f32 %v686, 0.0
        %v783 = vmax.f32 %v689, 0.0
        %v784 = vmax.f32 %v694, 0.0
        %v785 = vmax.f32 %v697, 0.0
        %v786 = vmax.f32 %v702, 0.0
        %v787 = vmax.f32 %v705, 0.0
        %v788 = vmax.f32 %v710, 0.0
        %v789 = vmax.f32 %v713, 0.0
        %v790 = vmax.f32 %v718, 0.0
        %v791 = vmax.f32 %v721, 0.0
        %v792 = vmax.f32 %v726, 0.0
        %v793 = vmax.f32 %v729, 0.0
        %v794 = vmax.f32 %v734, 0.0
        %v795 = vmax.f32 %v737, 0.0
        %v796 = vmax.f32 %v742, 0.0
        %v797 = vmax.f32 %v745, 0.0
        %v798 = vmax.f32 %v750, 0.0
        %v799 = vmax.f32 %v753, 0.0
        %v800 = vmax.f32 %v758, 0.0
        %v801 = vmax.f32 %v761, 0.0
        %v802 = vmax.f32 %v766, 0.0
        %v803 = vmax.f32 %v769, 0.0
        %v804 = vpack.c.bf16 %v773, %v772
        %v805 = vpack.c.bf16 %v775, %v774
        %v806 = vpack.c.bf16 %v777, %v776
        %v807 = vpack.c.bf16 %v779, %v778
        %v808 = vpack.c.bf16 %v781, %v780
        %v809 = vpack.c.bf16 %v783, %v782
        %v810 = vpack.c.bf16 %v785, %v784
        %v811 = vpack.c.bf16 %v787, %v786
        %v812 = vpack.c.bf16 %v789, %v788
        %v813 = vpack.c.bf16 %v791, %v790
        %v814 = vpack.c.bf16 %v793, %v792
        %v815 = vpack.c.bf16 %v795, %v794
        %v816 = vpack.c.bf16 %v797, %v796
        %v817 = vpack.c.bf16 %v799, %v798
        %v818 = vpack.c.bf16 %v801, %v800
        %v819 = vpack.c.bf16 %v803, %v802
        %v820 = vld [vmem:[#allocation7] sm:$0xf]
        %v821 = vld [vmem:[#allocation7 + $0x4] sm:$0xf]
        %v822 = vld [vmem:[#allocation7 + $0x8] sm:$0xf]
        %v823 = vld [vmem:[#allocation7 + $0xc] sm:$0xf]
        %v824 = vld [vmem:[#allocation7 + $0x10] sm:$0xf]
        %v825 = vld [vmem:[#allocation7 + $0x14] sm:$0xf]
        %v826 = vld [vmem:[#allocation7 + $0x18] sm:$0xf]
        %v827 = vld [vmem:[#allocation7 + $0x1c] sm:$0xf]
        %v828 = vld [vmem:[#allocation7 + $0x20] sm:$0xf]
        %v829 = vld [vmem:[#allocation7 + $0x24] sm:$0xf]
        %v830 = vld [vmem:[#allocation7 + $0x28] sm:$0xf]
        %v831 = vld [vmem:[#allocation7 + $0x2c] sm:$0xf]
        %v832 = vld [vmem:[#allocation7 + $0x30] sm:$0xf]
        %v833 = vld [vmem:[#allocation7 + $0x34] sm:$0xf]
        %v834 = vld [vmem:[#allocation7 + $0x38] sm:$0xf]
        %v835 = vld [vmem:[#allocation7 + $0x3c] sm:$0xf]
        %v836 = vld [vmem:[%s4] sm:$0x1]
        %v838 = vlaneseq
        %v839 = vshrl.u32 %v838, 7
        %v840 = vsub.s32 0, %v839
        %v841 = vrot.slane %v836, %v840
        %v859 = vunpack.c.l.b16 %v820
        %v860 = vunpack.c.l.b16 %v821
        %v861 = vunpack.c.l.b16 %v822
        %v862 = vunpack.c.l.b16 %v823
        %v863 = vunpack.c.l.b16 %v824
        %v864 = vunpack.c.l.b16 %v825
        %v865 = vunpack.c.l.b16 %v826
        %v866 = vunpack.c.l.b16 %v827
        %v867 = vunpack.c.l.b16 %v828
        %v868 = vunpack.c.l.b16 %v829
        %v869 = vunpack.c.l.b16 %v830
        %v870 = vunpack.c.l.b16 %v831
        %v871 = vunpack.c.l.b16 %v832
        %v872 = vunpack.c.l.b16 %v833
        %v873 = vunpack.c.l.b16 %v834
        %v874 = vunpack.c.l.b16 %v835
        %v875 = vpack.c.b16 %v860, %v859
        %v876 = vpack.c.b16 %v862, %v861
        %v877 = vpack.c.b16 %v864, %v863
        %v878 = vpack.c.b16 %v866, %v865
        %v879 = vpack.c.b16 %v868, %v867
        %v880 = vpack.c.b16 %v870, %v869
        %v881 = vpack.c.b16 %v872, %v871
        %v882 = vpack.c.b16 %v874, %v873
        %891 = vmatprep.subr.bf16.mxu0 0
        %892 = vmatpush1.bf16.msra.mxu0 %v882
        %893 = vmatprep.subr.bf16.mxu0 0
        %894 = vmatpush1.bf16.msra.mxu0 %v881
        %895 = vmatprep.subr.bf16.mxu0 0
        %896 = vmatpush1.bf16.msra.mxu0 %v880
        %897 = vmatprep.subr.bf16.mxu0 0
        %898 = vmatpush1.bf16.msra.mxu0 %v879
        %899 = vmatprep.subr.bf16.mxu0 0
        %900 = vmatpush1.bf16.msra.mxu0 %v878
        %901 = vmatprep.subr.bf16.mxu0 0
        %902 = vmatpush1.bf16.msra.mxu0 %v877
        %903 = vmatprep.subr.bf16.mxu0 0
        %904 = vmatpush1.bf16.msra.mxu0 %v876
        %905 = vmatprep.subr.bf16.mxu0 0
        %906 = vmatpush1.bf16.msra.mxu0 %v875
        %907 = vmatprep.subr.bf16.mxu0 0
        %908 = vmatpush2.bf16.msra.mxu0 0
        %909 = vmatprep.subr.bf16.mxu0 0
        %910 = vmatpush2.bf16.msra.mxu0 0
        %911 = vmatprep.subr.bf16.mxu0 0
        %912 = vmatpush2.bf16.msra.mxu0 0
        %913 = vmatprep.subr.bf16.mxu0 0
        %914 = vmatpush2.bf16.msra.mxu0 0
        %915 = vmatprep.subr.bf16.mxu0 0
        %916 = vmatpush2.bf16.msra.mxu0 0
        %917 = vmatprep.subr.bf16.mxu0 0
        %918 = vmatpush2.bf16.msra.mxu0 0
        %919 = vmatprep.subr.bf16.mxu0 0
        %920 = vmatpush2.bf16.msra.mxu0 0
        %921 = vmatprep.subr.bf16.mxu0 0
        %922 = vmatpush2.bf16.msra.mxu0 0
        %923 = vmatprep.mubr.bf16.mxu0 0
        %924 = vmatmul.mubr.bf16.gmra.mxu0 %v804
        %v925 = vpop.f32.mrf.mxu0
        %v926 = vadd.f32 %v841, %v925
        %v927 = vpop.f32.mrf.mxu0
        %v928 = vpop.f32.mrf.mxu0
        %v929 = vadd.f32 %v841, %v928
        %v930 = vpop.f32.mrf.mxu0
        %931 = vmatprep.mubr.bf16.mxu0 0
        %932 = vmatmul.mubr.bf16.gmra.mxu0 %v805
        %v933 = vpop.f32.mrf.mxu0
        %v934 = vadd.f32 %v841, %v933
        %v935 = vpop.f32.mrf.mxu0
        %v936 = vpop.f32.mrf.mxu0
        %v937 = vadd.f32 %v841, %v936
        %v938 = vpop.f32.mrf.mxu0
        %939 = vmatprep.mubr.bf16.mxu0 0
        %940 = vmatmul.mubr.bf16.gmra.mxu0 %v806
        %v941 = vpop.f32.mrf.mxu0
        %v942 = vadd.f32 %v841, %v941
        %v943 = vpop.f32.mrf.mxu0
        %v944 = vpop.f32.mrf.mxu0
        %v945 = vadd.f32 %v841, %v944
        %v946 = vpop.f32.mrf.mxu0
        %947 = vmatprep.mubr.bf16.mxu0 0
        %948 = vmatmul.mubr.bf16.gmra.mxu0 %v807
        %v949 = vpop.f32.mrf.mxu0
        %v950 = vadd.f32 %v841, %v949
        %v951 = vpop.f32.mrf.mxu0
        %v952 = vpop.f32.mrf.mxu0
        %v953 = vadd.f32 %v841, %v952
        %v954 = vpop.f32.mrf.mxu0
        %955 = vmatprep.mubr.bf16.mxu0 0
        %956 = vmatmul.mubr.bf16.gmra.mxu0 %v808
        %v957 = vpop.f32.mrf.mxu0
        %v958 = vadd.f32 %v841, %v957
        %v959 = vpop.f32.mrf.mxu0
        %v960 = vpop.f32.mrf.mxu0
        %v961 = vadd.f32 %v841, %v960
        %v962 = vpop.f32.mrf.mxu0
        %963 = vmatprep.mubr.bf16.mxu0 0
        %964 = vmatmul.mubr.bf16.gmra.mxu0 %v809
        %v965 = vpop.f32.mrf.mxu0
        %v966 = vadd.f32 %v841, %v965
        %v967 = vpop.f32.mrf.mxu0
        %v968 = vpop.f32.mrf.mxu0
        %v969 = vadd.f32 %v841, %v968
        %v970 = vpop.f32.mrf.mxu0
        %971 = vmatprep.mubr.bf16.mxu0 0
        %972 = vmatmul.mubr.bf16.gmra.mxu0 %v810
        %v973 = vpop.f32.mrf.mxu0
        %v974 = vadd.f32 %v841, %v973
        %v975 = vpop.f32.mrf.mxu0
        %v976 = vpop.f32.mrf.mxu0
        %v977 = vadd.f32 %v841, %v976
        %v978 = vpop.f32.mrf.mxu0
        %979 = vmatprep.mubr.bf16.mxu0 0
        %980 = vmatmul.mubr.bf16.gmra.mxu0 %v811
        %v981 = vpop.f32.mrf.mxu0
        %v982 = vadd.f32 %v841, %v981
        %v983 = vpop.f32.mrf.mxu0
        %v984 = vpop.f32.mrf.mxu0
        %v985 = vadd.f32 %v841, %v984
        %v986 = vpop.f32.mrf.mxu0
        %987 = vmatprep.mubr.bf16.mxu0 0
        %988 = vmatmul.mubr.bf16.gmra.mxu0 %v812
        %v989 = vpop.f32.mrf.mxu0
        %v990 = vadd.f32 %v841, %v989
        %v991 = vpop.f32.mrf.mxu0
        %v992 = vpop.f32.mrf.mxu0
        %v993 = vadd.f32 %v841, %v992
        %v994 = vpop.f32.mrf.mxu0
        %995 = vmatprep.mubr.bf16.mxu0 0
        %996 = vmatmul.mubr.bf16.gmra.mxu0 %v813
        %v997 = vpop.f32.mrf.mxu0
        %v998 = vadd.f32 %v841, %v997
        %v999 = vpop.f32.mrf.mxu0
        %v1000 = vpop.f32.mrf.mxu0
        %v1001 = vadd.f32 %v841, %v1000
        %v1002 = vpop.f32.mrf.mxu0
        %1003 = vmatprep.mubr.bf16.mxu0 0
        %1004 = vmatmul.mubr.bf16.gmra.mxu0 %v814
        %v1005 = vpop.f32.mrf.mxu0
        %v1006 = vadd.f32 %v841, %v1005
        %v1007 = vpop.f32.mrf.mxu0
        %v1008 = vpop.f32.mrf.mxu0
        %v1009 = vadd.f32 %v841, %v1008
        %v1010 = vpop.f32.mrf.mxu0
        %1011 = vmatprep.mubr.bf16.mxu0 0
        %1012 = vmatmul.mubr.bf16.gmra.mxu0 %v815
        %v1013 = vpop.f32.mrf.mxu0
        %v1014 = vadd.f32 %v841, %v1013
        %v1015 = vpop.f32.mrf.mxu0
        %v1016 = vpop.f32.mrf.mxu0
        %v1017 = vadd.f32 %v841, %v1016
        %v1018 = vpop.f32.mrf.mxu0
        %1019 = vmatprep.mubr.bf16.mxu0 0
        %1020 = vmatmul.mubr.bf16.gmra.mxu0 %v816
        %v1021 = vpop.f32.mrf.mxu0
        %v1022 = vadd.f32 %v841, %v1021
        %v1023 = vpop.f32.mrf.mxu0
        %v1024 = vpop.f32.mrf.mxu0
        %v1025 = vadd.f32 %v841, %v1024
        %v1026 = vpop.f32.mrf.mxu0
        %1027 = vmatprep.mubr.bf16.mxu0 0
        %1028 = vmatmul.mubr.bf16.gmra.mxu0 %v817
        %v1029 = vpop.f32.mrf.mxu0
        %v1030 = vadd.f32 %v841, %v1029
        %v1031 = vpop.f32.mrf.mxu0
        %v1032 = vpop.f32.mrf.mxu0
        %v1033 = vadd.f32 %v841, %v1032
        %v1034 = vpop.f32.mrf.mxu0
        %1035 = vmatprep.mubr.bf16.mxu0 0
        %1036 = vmatmul.mubr.bf16.gmra.mxu0 %v818
        %v1037 = vpop.f32.mrf.mxu0
        %v1038 = vadd.f32 %v841, %v1037
        %v1039 = vpop.f32.mrf.mxu0
        %v1040 = vpop.f32.mrf.mxu0
        %v1041 = vadd.f32 %v841, %v1040
        %v1042 = vpop.f32.mrf.mxu0
        %1043 = vmatprep.mubr.bf16.mxu0 0
        %1044 = vmatmul.mubr.bf16.gmra.mxu0 %v819
        %v1045 = vpop.f32.mrf.mxu0
        %v1046 = vadd.f32 %v841, %v1045
        %v1047 = vpop.f32.mrf.mxu0
        %v1048 = vpop.f32.mrf.mxu0
        %v1049 = vadd.f32 %v841, %v1048
        %v1050 = vpop.f32.mrf.mxu0
        %1051 = vdwg.mxu0
        %v1052 = vpack.c.bf16 %v929, %v926
        %v1053 = vpack.c.bf16 %v937, %v934
        %v1054 = vpack.c.bf16 %v945, %v942
        %v1055 = vpack.c.bf16 %v953, %v950
        %v1056 = vpack.c.bf16 %v961, %v958
        %v1057 = vpack.c.bf16 %v969, %v966
        %v1058 = vpack.c.bf16 %v977, %v974
        %v1059 = vpack.c.bf16 %v985, %v982
        %v1060 = vpack.c.bf16 %v993, %v990
        %v1061 = vpack.c.bf16 %v1001, %v998
        %v1062 = vpack.c.bf16 %v1009, %v1006
        %v1063 = vpack.c.bf16 %v1017, %v1014
        %v1064 = vpack.c.bf16 %v1025, %v1022
        %v1065 = vpack.c.bf16 %v1033, %v1030
        %v1066 = vpack.c.bf16 %v1041, %v1038
        %v1067 = vpack.c.bf16 %v1049, %v1046
        %v1068 = vld [vmem:[#allocation8] sm:$0xf]
        %v1069 = vld [vmem:[#allocation8 + $0x4] sm:$0xf]
        %v1070 = vld [vmem:[#allocation8 + $0x8] sm:$0xf]
        %v1071 = vld [vmem:[#allocation8 + $0xc] sm:$0xf]
        %v1072 = vld [vmem:[#allocation8 + $0x10] sm:$0xf]
        %v1073 = vld [vmem:[#allocation8 + $0x14] sm:$0xf]
        %v1074 = vld [vmem:[#allocation8 + $0x18] sm:$0xf]
        %v1075 = vld [vmem:[#allocation8 + $0x1c] sm:$0xf]
        %v1076 = vld [vmem:[#allocation8 + $0x20] sm:$0xf]
        %v1077 = vld [vmem:[#allocation8 + $0x24] sm:$0xf]
        %v1078 = vld [vmem:[#allocation8 + $0x28] sm:$0xf]
        %v1079 = vld [vmem:[#allocation8 + $0x2c] sm:$0xf]
        %v1080 = vld [vmem:[#allocation8 + $0x30] sm:$0xf]
        %v1081 = vld [vmem:[#allocation8 + $0x34] sm:$0xf]
        %v1082 = vld [vmem:[#allocation8 + $0x38] sm:$0xf]
        %v1083 = vld [vmem:[#allocation8 + $0x3c] sm:$0xf]
        %v1084 = vld [vmem:[%s6] sm:$0x1]
        %v1086 = vlaneseq
        %v1087 = vshrl.u32 %v1086, 7
        %v1088 = vsub.s32 0, %v1087
        %v1089 = vrot.slane %v1084, %v1088
        %v1107 = vunpack.c.l.b16 %v1068
        %v1108 = vunpack.c.l.b16 %v1069
        %v1109 = vunpack.c.l.b16 %v1070
        %v1110 = vunpack.c.l.b16 %v1071
        %v1111 = vunpack.c.l.b16 %v1072
        %v1112 = vunpack.c.l.b16 %v1073
        %v1113 = vunpack.c.l.b16 %v1074
        %v1114 = vunpack.c.l.b16 %v1075
        %v1115 = vunpack.c.l.b16 %v1076
        %v1116 = vunpack.c.l.b16 %v1077
        %v1117 = vunpack.c.l.b16 %v1078
        %v1118 = vunpack.c.l.b16 %v1079
        %v1119 = vunpack.c.l.b16 %v1080
        %v1120 = vunpack.c.l.b16 %v1081
        %v1121 = vunpack.c.l.b16 %v1082
        %v1122 = vunpack.c.l.b16 %v1083
        %v1123 = vpack.c.b16 %v1108, %v1107
        %v1124 = vpack.c.b16 %v1110, %v1109
        %v1125 = vpack.c.b16 %v1112, %v1111
        %v1126 = vpack.c.b16 %v1114, %v1113
        %v1127 = vpack.c.b16 %v1116, %v1115
        %v1128 = vpack.c.b16 %v1118, %v1117
        %v1129 = vpack.c.b16 %v1120, %v1119
        %v1130 = vpack.c.b16 %v1122, %v1121
        %1139 = vmatprep.subr.bf16.mxu0 0
        %1140 = vmatpush1.bf16.msra.mxu0 %v1130
        %1141 = vmatprep.subr.bf16.mxu0 0
        %1142 = vmatpush1.bf16.msra.mxu0 %v1129
        %1143 = vmatprep.subr.bf16.mxu0 0
        %1144 = vmatpush1.bf16.msra.mxu0 %v1128
        %1145 = vmatprep.subr.bf16.mxu0 0
        %1146 = vmatpush1.bf16.msra.mxu0 %v1127
        %1147 = vmatprep.subr.bf16.mxu0 0
        %1148 = vmatpush1.bf16.msra.mxu0 %v1126
        %1149 = vmatprep.subr.bf16.mxu0 0
        %1150 = vmatpush1.bf16.msra.mxu0 %v1125
        %1151 = vmatprep.subr.bf16.mxu0 0
        %1152 = vmatpush1.bf16.msra.mxu0 %v1124
        %1153 = vmatprep.subr.bf16.mxu0 0
        %1154 = vmatpush1.bf16.msra.mxu0 %v1123
        %1155 = vmatprep.subr.bf16.mxu0 0
        %1156 = vmatpush2.bf16.msra.mxu0 0
        %1157 = vmatprep.subr.bf16.mxu0 0
        %1158 = vmatpush2.bf16.msra.mxu0 0
        %1159 = vmatprep.subr.bf16.mxu0 0
        %1160 = vmatpush2.bf16.msra.mxu0 0
        %1161 = vmatprep.subr.bf16.mxu0 0
        %1162 = vmatpush2.bf16.msra.mxu0 0
        %1163 = vmatprep.subr.bf16.mxu0 0
        %1164 = vmatpush2.bf16.msra.mxu0 0
        %1165 = vmatprep.subr.bf16.mxu0 0
        %1166 = vmatpush2.bf16.msra.mxu0 0
        %1167 = vmatprep.subr.bf16.mxu0 0
        %1168 = vmatpush2.bf16.msra.mxu0 0
        %1169 = vmatprep.subr.bf16.mxu0 0
        %1170 = vmatpush2.bf16.msra.mxu0 0
        %1171 = vmatprep.mubr.bf16.mxu0 0
        %1172 = vmatmul.mubr.bf16.gmra.mxu0 %v1052
        %v1173 = vpop.f32.mrf.mxu0
        %v1174 = vadd.f32 %v1089, %v1173
        %v1175 = vpop.f32.mrf.mxu0
        %v1176 = vpop.f32.mrf.mxu0
        %v1177 = vadd.f32 %v1089, %v1176
        %v1178 = vpop.f32.mrf.mxu0
        %1179 = vmatprep.mubr.bf16.mxu0 0
        %1180 = vmatmul.mubr.bf16.gmra.mxu0 %v1053
        %v1181 = vpop.f32.mrf.mxu0
        %v1182 = vadd.f32 %v1089, %v1181
        %v1183 = vpop.f32.mrf.mxu0
        %v1184 = vpop.f32.mrf.mxu0
        %v1185 = vadd.f32 %v1089, %v1184
        %v1186 = vpop.f32.mrf.mxu0
        %1187 = vmatprep.mubr.bf16.mxu0 0
        %1188 = vmatmul.mubr.bf16.gmra.mxu0 %v1054
        %v1189 = vpop.f32.mrf.mxu0
        %v1190 = vadd.f32 %v1089, %v1189
        %v1191 = vpop.f32.mrf.mxu0
        %v1192 = vpop.f32.mrf.mxu0
        %v1193 = vadd.f32 %v1089, %v1192
        %v1194 = vpop.f32.mrf.mxu0
        %1195 = vmatprep.mubr.bf16.mxu0 0
        %1196 = vmatmul.mubr.bf16.gmra.mxu0 %v1055
        %v1197 = vpop.f32.mrf.mxu0
        %v1198 = vadd.f32 %v1089, %v1197
        %v1199 = vpop.f32.mrf.mxu0
        %v1200 = vpop.f32.mrf.mxu0
        %v1201 = vadd.f32 %v1089, %v1200
        %v1202 = vpop.f32.mrf.mxu0
        %1203 = vmatprep.mubr.bf16.mxu0 0
        %1204 = vmatmul.mubr.bf16.gmra.mxu0 %v1056
        %v1205 = vpop.f32.mrf.mxu0
        %v1206 = vadd.f32 %v1089, %v1205
        %v1207 = vpop.f32.mrf.mxu0
        %v1208 = vpop.f32.mrf.mxu0
        %v1209 = vadd.f32 %v1089, %v1208
        %v1210 = vpop.f32.mrf.mxu0
        %1211 = vmatprep.mubr.bf16.mxu0 0
        %1212 = vmatmul.mubr.bf16.gmra.mxu0 %v1057
        %v1213 = vpop.f32.mrf.mxu0
        %v1214 = vadd.f32 %v1089, %v1213
        %v1215 = vpop.f32.mrf.mxu0
        %v1216 = vpop.f32.mrf.mxu0
        %v1217 = vadd.f32 %v1089, %v1216
        %v1218 = vpop.f32.mrf.mxu0
        %1219 = vmatprep.mubr.bf16.mxu0 0
        %1220 = vmatmul.mubr.bf16.gmra.mxu0 %v1058
        %v1221 = vpop.f32.mrf.mxu0
        %v1222 = vadd.f32 %v1089, %v1221
        %v1223 = vpop.f32.mrf.mxu0
        %v1224 = vpop.f32.mrf.mxu0
        %v1225 = vadd.f32 %v1089, %v1224
        %v1226 = vpop.f32.mrf.mxu0
        %1227 = vmatprep.mubr.bf16.mxu0 0
        %1228 = vmatmul.mubr.bf16.gmra.mxu0 %v1059
        %v1229 = vpop.f32.mrf.mxu0
        %v1230 = vadd.f32 %v1089, %v1229
        %v1231 = vpop.f32.mrf.mxu0
        %v1232 = vpop.f32.mrf.mxu0
        %v1233 = vadd.f32 %v1089, %v1232
        %v1234 = vpop.f32.mrf.mxu0
        %1235 = vmatprep.mubr.bf16.mxu0 0
        %1236 = vmatmul.mubr.bf16.gmra.mxu0 %v1060
        %v1237 = vpop.f32.mrf.mxu0
        %v1238 = vadd.f32 %v1089, %v1237
        %v1239 = vpop.f32.mrf.mxu0
        %v1240 = vpop.f32.mrf.mxu0
        %v1241 = vadd.f32 %v1089, %v1240
        %v1242 = vpop.f32.mrf.mxu0
        %1243 = vmatprep.mubr.bf16.mxu0 0
        %1244 = vmatmul.mubr.bf16.gmra.mxu0 %v1061
        %v1245 = vpop.f32.mrf.mxu0
        %v1246 = vadd.f32 %v1089, %v1245
        %v1247 = vpop.f32.mrf.mxu0
        %v1248 = vpop.f32.mrf.mxu0
        %v1249 = vadd.f32 %v1089, %v1248
        %v1250 = vpop.f32.mrf.mxu0
        %1251 = vmatprep.mubr.bf16.mxu0 0
        %1252 = vmatmul.mubr.bf16.gmra.mxu0 %v1062
        %v1253 = vpop.f32.mrf.mxu0
        %v1254 = vadd.f32 %v1089, %v1253
        %v1255 = vpop.f32.mrf.mxu0
        %v1256 = vpop.f32.mrf.mxu0
        %v1257 = vadd.f32 %v1089, %v1256
        %v1258 = vpop.f32.mrf.mxu0
        %1259 = vmatprep.mubr.bf16.mxu0 0
        %1260 = vmatmul.mubr.bf16.gmra.mxu0 %v1063
        %v1261 = vpop.f32.mrf.mxu0
        %v1262 = vadd.f32 %v1089, %v1261
        %v1263 = vpop.f32.mrf.mxu0
        %v1264 = vpop.f32.mrf.mxu0
        %v1265 = vadd.f32 %v1089, %v1264
        %v1266 = vpop.f32.mrf.mxu0
        %1267 = vmatprep.mubr.bf16.mxu0 0
        %1268 = vmatmul.mubr.bf16.gmra.mxu0 %v1064
        %v1269 = vpop.f32.mrf.mxu0
        %v1270 = vadd.f32 %v1089, %v1269
        %v1271 = vpop.f32.mrf.mxu0
        %v1272 = vpop.f32.mrf.mxu0
        %v1273 = vadd.f32 %v1089, %v1272
        %v1274 = vpop.f32.mrf.mxu0
        %1275 = vmatprep.mubr.bf16.mxu0 0
        %1276 = vmatmul.mubr.bf16.gmra.mxu0 %v1065
        %v1277 = vpop.f32.mrf.mxu0
        %v1278 = vadd.f32 %v1089, %v1277
        %v1279 = vpop.f32.mrf.mxu0
        %v1280 = vpop.f32.mrf.mxu0
        %v1281 = vadd.f32 %v1089, %v1280
        %v1282 = vpop.f32.mrf.mxu0
        %1283 = vmatprep.mubr.bf16.mxu0 0
        %1284 = vmatmul.mubr.bf16.gmra.mxu0 %v1066
        %v1285 = vpop.f32.mrf.mxu0
        %v1286 = vadd.f32 %v1089, %v1285
        %v1287 = vpop.f32.mrf.mxu0
        %v1288 = vpop.f32.mrf.mxu0
        %v1289 = vadd.f32 %v1089, %v1288
        %v1290 = vpop.f32.mrf.mxu0
        %1291 = vmatprep.mubr.bf16.mxu0 0
        %1292 = vmatmul.mubr.bf16.gmra.mxu0 %v1067
        %v1293 = vpop.f32.mrf.mxu0
        %v1294 = vadd.f32 %v1089, %v1293
        %v1295 = vpop.f32.mrf.mxu0
        %v1296 = vpop.f32.mrf.mxu0
        %v1297 = vadd.f32 %v1089, %v1296
        %v1298 = vpop.f32.mrf.mxu0
        %1299 = vdwg.mxu0
        %v1300 = vmax.f32 %v1174, 0.0
        %v1301 = vmax.f32 %v1177, 0.0
        %v1302 = vmax.f32 %v1182, 0.0
        %v1303 = vmax.f32 %v1185, 0.0
        %v1304 = vmax.f32 %v1190, 0.0
        %v1305 = vmax.f32 %v1193, 0.0
        %v1306 = vmax.f32 %v1198, 0.0
        %v1307 = vmax.f32 %v1201, 0.0
        %v1308 = vmax.f32 %v1206, 0.0
        %v1309 = vmax.f32 %v1209, 0.0
        %v1310 = vmax.f32 %v1214, 0.0
        %v1311 = vmax.f32 %v1217, 0.0
        %v1312 = vmax.f32 %v1222, 0.0
        %v1313 = vmax.f32 %v1225, 0.0
        %v1314 = vmax.f32 %v1230, 0.0
        %v1315 = vmax.f32 %v1233, 0.0
        %v1316 = vmax.f32 %v1238, 0.0
        %v1317 = vmax.f32 %v1241, 0.0
        %v1318 = vmax.f32 %v1246, 0.0
        %v1319 = vmax.f32 %v1249, 0.0
        %v1320 = vmax.f32 %v1254, 0.0
        %v1321 = vmax.f32 %v1257, 0.0
        %v1322 = vmax.f32 %v1262, 0.0
        %v1323 = vmax.f32 %v1265, 0.0
        %v1324 = vmax.f32 %v1270, 0.0
        %v1325 = vmax.f32 %v1273, 0.0
        %v1326 = vmax.f32 %v1278, 0.0
        %v1327 = vmax.f32 %v1281, 0.0
        %v1328 = vmax.f32 %v1286, 0.0
        %v1329 = vmax.f32 %v1289, 0.0
        %v1330 = vmax.f32 %v1294, 0.0
        %v1331 = vmax.f32 %v1297, 0.0
        %v1332 = vpack.c.bf16 %v1301, %v1300
        %v1333 = vpack.c.bf16 %v1303, %v1302
        %v1334 = vpack.c.bf16 %v1305, %v1304
        %v1335 = vpack.c.bf16 %v1307, %v1306
        %v1336 = vpack.c.bf16 %v1309, %v1308
        %v1337 = vpack.c.bf16 %v1311, %v1310
        %v1338 = vpack.c.bf16 %v1313, %v1312
        %v1339 = vpack.c.bf16 %v1315, %v1314
        %v1340 = vpack.c.bf16 %v1317, %v1316
        %v1341 = vpack.c.bf16 %v1319, %v1318
        %v1342 = vpack.c.bf16 %v1321, %v1320
        %v1343 = vpack.c.bf16 %v1323, %v1322
        %v1344 = vpack.c.bf16 %v1325, %v1324
        %v1345 = vpack.c.bf16 %v1327, %v1326
        %v1346 = vpack.c.bf16 %v1329, %v1328
        %v1347 = vpack.c.bf16 %v1331, %v1330
        %v1348 = vld [vmem:[#allocation10] sm:$0xf]
        %v1349 = vld [vmem:[#allocation10 + $0x4] sm:$0xf]
        %v1350 = vld [vmem:[#allocation10 + $0x8] sm:$0xf]
        %v1351 = vld [vmem:[#allocation10 + $0xc] sm:$0xf]
        %v1352 = vld [vmem:[#allocation10 + $0x10] sm:$0xf]
        %v1353 = vld [vmem:[#allocation10 + $0x14] sm:$0xf]
        %v1354 = vld [vmem:[#allocation10 + $0x18] sm:$0xf]
        %v1355 = vld [vmem:[#allocation10 + $0x1c] sm:$0xf]
        %v1356 = vld [vmem:[#allocation10 + $0x20] sm:$0xf]
        %v1357 = vld [vmem:[#allocation10 + $0x24] sm:$0xf]
        %v1358 = vld [vmem:[#allocation10 + $0x28] sm:$0xf]
        %v1359 = vld [vmem:[#allocation10 + $0x2c] sm:$0xf]
        %v1360 = vld [vmem:[#allocation10 + $0x30] sm:$0xf]
        %v1361 = vld [vmem:[#allocation10 + $0x34] sm:$0xf]
        %v1362 = vld [vmem:[#allocation10 + $0x38] sm:$0xf]
        %v1363 = vld [vmem:[#allocation10 + $0x3c] sm:$0xf]
        %v1364 = vld [vmem:[%s8] sm:$0x1]
        %v1366 = vlaneseq
        %v1367 = vshrl.u32 %v1366, 7
        %v1368 = vsub.s32 0, %v1367
        %v1369 = vrot.slane %v1364, %v1368
        %v1387 = vunpack.c.l.b16 %v1348
        %v1388 = vunpack.c.l.b16 %v1349
        %v1389 = vunpack.c.l.b16 %v1350
        %v1390 = vunpack.c.l.b16 %v1351
        %v1391 = vunpack.c.l.b16 %v1352
        %v1392 = vunpack.c.l.b16 %v1353
        %v1393 = vunpack.c.l.b16 %v1354
        %v1394 = vunpack.c.l.b16 %v1355
        %v1395 = vunpack.c.l.b16 %v1356
        %v1396 = vunpack.c.l.b16 %v1357
        %v1397 = vunpack.c.l.b16 %v1358
        %v1398 = vunpack.c.l.b16 %v1359
        %v1399 = vunpack.c.l.b16 %v1360
        %v1400 = vunpack.c.l.b16 %v1361
        %v1401 = vunpack.c.l.b16 %v1362
        %v1402 = vunpack.c.l.b16 %v1363
        %v1403 = vpack.c.b16 %v1388, %v1387
        %v1404 = vpack.c.b16 %v1390, %v1389
        %v1405 = vpack.c.b16 %v1392, %v1391
        %v1406 = vpack.c.b16 %v1394, %v1393
        %v1407 = vpack.c.b16 %v1396, %v1395
        %v1408 = vpack.c.b16 %v1398, %v1397
        %v1409 = vpack.c.b16 %v1400, %v1399
        %v1410 = vpack.c.b16 %v1402, %v1401
        %1419 = vmatprep.subr.bf16.mxu0 0
        %1420 = vmatpush1.bf16.msra.mxu0 %v1410
        %1421 = vmatprep.subr.bf16.mxu0 0
        %1422 = vmatpush1.bf16.msra.mxu0 %v1409
        %1423 = vmatprep.subr.bf16.mxu0 0
        %1424 = vmatpush1.bf16.msra.mxu0 %v1408
        %1425 = vmatprep.subr.bf16.mxu0 0
        %1426 = vmatpush1.bf16.msra.mxu0 %v1407
        %1427 = vmatprep.subr.bf16.mxu0 0
        %1428 = vmatpush1.bf16.msra.mxu0 %v1406
        %1429 = vmatprep.subr.bf16.mxu0 0
        %1430 = vmatpush1.bf16.msra.mxu0 %v1405
        %1431 = vmatprep.subr.bf16.mxu0 0
        %1432 = vmatpush1.bf16.msra.mxu0 %v1404
        %1433 = vmatprep.subr.bf16.mxu0 0
        %1434 = vmatpush1.bf16.msra.mxu0 %v1403
        %1435 = vmatprep.subr.bf16.mxu0 0
        %1436 = vmatpush2.bf16.msra.mxu0 0
        %1437 = vmatprep.subr.bf16.mxu0 0
        %1438 = vmatpush2.bf16.msra.mxu0 0
        %1439 = vmatprep.subr.bf16.mxu0 0
        %1440 = vmatpush2.bf16.msra.mxu0 0
        %1441 = vmatprep.subr.bf16.mxu0 0
        %1442 = vmatpush2.bf16.msra.mxu0 0
        %1443 = vmatprep.subr.bf16.mxu0 0
        %1444 = vmatpush2.bf16.msra.mxu0 0
        %1445 = vmatprep.subr.bf16.mxu0 0
        %1446 = vmatpush2.bf16.msra.mxu0 0
        %1447 = vmatprep.subr.bf16.mxu0 0
        %1448 = vmatpush2.bf16.msra.mxu0 0
        %1449 = vmatprep.subr.bf16.mxu0 0
        %1450 = vmatpush2.bf16.msra.mxu0 0
        %1451 = vmatprep.mubr.bf16.mxu0 0
        %1452 = vmatmul.mubr.bf16.gmra.mxu0 %v1332
        %v1453 = vpop.f32.mrf.mxu0
        %v1454 = vadd.f32 %v1369, %v1453
        %v1455 = vpop.f32.mrf.mxu0
        %v1456 = vpop.f32.mrf.mxu0
        %v1457 = vadd.f32 %v1369, %v1456
        %v1458 = vpop.f32.mrf.mxu0
        %1459 = vmatprep.mubr.bf16.mxu0 0
        %1460 = vmatmul.mubr.bf16.gmra.mxu0 %v1333
        %v1461 = vpop.f32.mrf.mxu0
        %v1462 = vadd.f32 %v1369, %v1461
        %v1463 = vpop.f32.mrf.mxu0
        %v1464 = vpop.f32.mrf.mxu0
        %v1465 = vadd.f32 %v1369, %v1464
        %v1466 = vpop.f32.mrf.mxu0
        %1467 = vmatprep.mubr.bf16.mxu0 0
        %1468 = vmatmul.mubr.bf16.gmra.mxu0 %v1334
        %v1469 = vpop.f32.mrf.mxu0
        %v1470 = vadd.f32 %v1369, %v1469
        %v1471 = vpop.f32.mrf.mxu0
        %v1472 = vpop.f32.mrf.mxu0
        %v1473 = vadd.f32 %v1369, %v1472
        %v1474 = vpop.f32.mrf.mxu0
        %1475 = vmatprep.mubr.bf16.mxu0 0
        %1476 = vmatmul.mubr.bf16.gmra.mxu0 %v1335
        %v1477 = vpop.f32.mrf.mxu0
        %v1478 = vadd.f32 %v1369, %v1477
        %v1479 = vpop.f32.mrf.mxu0
        %v1480 = vpop.f32.mrf.mxu0
        %v1481 = vadd.f32 %v1369, %v1480
        %v1482 = vpop.f32.mrf.mxu0
        %1483 = vmatprep.mubr.bf16.mxu0 0
        %1484 = vmatmul.mubr.bf16.gmra.mxu0 %v1336
        %v1485 = vpop.f32.mrf.mxu0
        %v1486 = vadd.f32 %v1369, %v1485
        %v1487 = vpop.f32.mrf.mxu0
        %v1488 = vpop.f32.mrf.mxu0
        %v1489 = vadd.f32 %v1369, %v1488
        %v1490 = vpop.f32.mrf.mxu0
        %1491 = vmatprep.mubr.bf16.mxu0 0
        %1492 = vmatmul.mubr.bf16.gmra.mxu0 %v1337
        %v1493 = vpop.f32.mrf.mxu0
        %v1494 = vadd.f32 %v1369, %v1493
        %v1495 = vpop.f32.mrf.mxu0
        %v1496 = vpop.f32.mrf.mxu0
        %v1497 = vadd.f32 %v1369, %v1496
        %v1498 = vpop.f32.mrf.mxu0
        %1499 = vmatprep.mubr.bf16.mxu0 0
        %1500 = vmatmul.mubr.bf16.gmra.mxu0 %v1338
        %v1501 = vpop.f32.mrf.mxu0
        %v1502 = vadd.f32 %v1369, %v1501
        %v1503 = vpop.f32.mrf.mxu0
        %v1504 = vpop.f32.mrf.mxu0
        %v1505 = vadd.f32 %v1369, %v1504
        %v1506 = vpop.f32.mrf.mxu0
        %1507 = vmatprep.mubr.bf16.mxu0 0
        %1508 = vmatmul.mubr.bf16.gmra.mxu0 %v1339
        %v1509 = vpop.f32.mrf.mxu0
        %v1510 = vadd.f32 %v1369, %v1509
        %v1511 = vpop.f32.mrf.mxu0
        %v1512 = vpop.f32.mrf.mxu0
        %v1513 = vadd.f32 %v1369, %v1512
        %v1514 = vpop.f32.mrf.mxu0
        %1515 = vmatprep.mubr.bf16.mxu0 0
        %1516 = vmatmul.mubr.bf16.gmra.mxu0 %v1340
        %v1517 = vpop.f32.mrf.mxu0
        %v1518 = vadd.f32 %v1369, %v1517
        %v1519 = vpop.f32.mrf.mxu0
        %v1520 = vpop.f32.mrf.mxu0
        %v1521 = vadd.f32 %v1369, %v1520
        %v1522 = vpop.f32.mrf.mxu0
        %1523 = vmatprep.mubr.bf16.mxu0 0
        %1524 = vmatmul.mubr.bf16.gmra.mxu0 %v1341
        %v1525 = vpop.f32.mrf.mxu0
        %v1526 = vadd.f32 %v1369, %v1525
        %v1527 = vpop.f32.mrf.mxu0
        %v1528 = vpop.f32.mrf.mxu0
        %v1529 = vadd.f32 %v1369, %v1528
        %v1530 = vpop.f32.mrf.mxu0
        %1531 = vmatprep.mubr.bf16.mxu0 0
        %1532 = vmatmul.mubr.bf16.gmra.mxu0 %v1342
        %v1533 = vpop.f32.mrf.mxu0
        %v1534 = vadd.f32 %v1369, %v1533
        %v1535 = vpop.f32.mrf.mxu0
        %v1536 = vpop.f32.mrf.mxu0
        %v1537 = vadd.f32 %v1369, %v1536
        %v1538 = vpop.f32.mrf.mxu0
        %1539 = vmatprep.mubr.bf16.mxu0 0
        %1540 = vmatmul.mubr.bf16.gmra.mxu0 %v1343
        %v1541 = vpop.f32.mrf.mxu0
        %v1542 = vadd.f32 %v1369, %v1541
        %v1543 = vpop.f32.mrf.mxu0
        %v1544 = vpop.f32.mrf.mxu0
        %v1545 = vadd.f32 %v1369, %v1544
        %v1546 = vpop.f32.mrf.mxu0
        %1547 = vmatprep.mubr.bf16.mxu0 0
        %1548 = vmatmul.mubr.bf16.gmra.mxu0 %v1344
        %v1549 = vpop.f32.mrf.mxu0
        %v1550 = vadd.f32 %v1369, %v1549
        %v1551 = vpop.f32.mrf.mxu0
        %v1552 = vpop.f32.mrf.mxu0
        %v1553 = vadd.f32 %v1369, %v1552
        %v1554 = vpop.f32.mrf.mxu0
        %1555 = vmatprep.mubr.bf16.mxu0 0
        %1556 = vmatmul.mubr.bf16.gmra.mxu0 %v1345
        %v1557 = vpop.f32.mrf.mxu0
        %v1558 = vadd.f32 %v1369, %v1557
        %v1559 = vpop.f32.mrf.mxu0
        %v1560 = vpop.f32.mrf.mxu0
        %v1561 = vadd.f32 %v1369, %v1560
        %v1562 = vpop.f32.mrf.mxu0
        %1563 = vmatprep.mubr.bf16.mxu0 0
        %1564 = vmatmul.mubr.bf16.gmra.mxu0 %v1346
        %v1565 = vpop.f32.mrf.mxu0
        %v1566 = vadd.f32 %v1369, %v1565
        %v1567 = vpop.f32.mrf.mxu0
        %v1568 = vpop.f32.mrf.mxu0
        %v1569 = vadd.f32 %v1369, %v1568
        %v1570 = vpop.f32.mrf.mxu0
        %1571 = vmatprep.mubr.bf16.mxu0 0
        %1572 = vmatmul.mubr.bf16.gmra.mxu0 %v1347
        %v1573 = vpop.f32.mrf.mxu0
        %v1574 = vadd.f32 %v1369, %v1573
        %v1575 = vpop.f32.mrf.mxu0
        %v1576 = vpop.f32.mrf.mxu0
        %v1577 = vadd.f32 %v1369, %v1576
        %v1578 = vpop.f32.mrf.mxu0
        %1579 = vdwg.mxu0
        %v1580 = vxor.u32 %v1454, 2147483648
        %v1581 = vxor.u32 %v1457, 2147483648
        %v1582 = vxor.u32 %v1462, 2147483648
        %v1583 = vxor.u32 %v1465, 2147483648
        %v1584 = vxor.u32 %v1470, 2147483648
        %v1585 = vxor.u32 %v1473, 2147483648
        %v1586 = vxor.u32 %v1478, 2147483648
        %v1587 = vxor.u32 %v1481, 2147483648
        %v1588 = vxor.u32 %v1486, 2147483648
        %v1589 = vxor.u32 %v1489, 2147483648
        %v1590 = vxor.u32 %v1494, 2147483648
        %v1591 = vxor.u32 %v1497, 2147483648
        %v1592 = vxor.u32 %v1502, 2147483648
        %v1593 = vxor.u32 %v1505, 2147483648
        %v1594 = vxor.u32 %v1510, 2147483648
        %v1595 = vxor.u32 %v1513, 2147483648
        %v1596 = vxor.u32 %v1518, 2147483648
        %v1597 = vxor.u32 %v1521, 2147483648
        %v1598 = vxor.u32 %v1526, 2147483648
        %v1599 = vxor.u32 %v1529, 2147483648
        %v1600 = vxor.u32 %v1534, 2147483648
        %v1601 = vxor.u32 %v1537, 2147483648
        %v1602 = vxor.u32 %v1542, 2147483648
        %v1603 = vxor.u32 %v1545, 2147483648
        %v1604 = vxor.u32 %v1550, 2147483648
        %v1605 = vxor.u32 %v1553, 2147483648
        %v1606 = vxor.u32 %v1558, 2147483648
        %v1607 = vxor.u32 %v1561, 2147483648
        %v1608 = vxor.u32 %v1566, 2147483648
        %v1609 = vxor.u32 %v1569, 2147483648
        %v1610 = vxor.u32 %v1574, 2147483648
        %v1611 = vxor.u32 %v1577, 2147483648
        %v1612 = vmul.f32 %v1580, 1.442695
        %v1613 = vpow.pop %v1612
        %v1614 = vmul.f32 %v1581, 1.442695
        %v1615 = vpow.pop %v1614
        %v1616 = vmul.f32 %v1582, 1.442695
        %v1617 = vpow.pop %v1616
        %v1618 = vmul.f32 %v1583, 1.442695
        %v1619 = vpow.pop %v1618
        %v1620 = vmul.f32 %v1584, 1.442695
        %v1621 = vpow.pop %v1620
        %v1622 = vmul.f32 %v1585, 1.442695
        %v1623 = vpow.pop %v1622
        %v1624 = vmul.f32 %v1586, 1.442695
        %v1625 = vpow.pop %v1624
        %v1626 = vmul.f32 %v1587, 1.442695
        %v1627 = vpow.pop %v1626
        %v1628 = vmul.f32 %v1588, 1.442695
        %v1629 = vpow.pop %v1628
        %v1630 = vmul.f32 %v1589, 1.442695
        %v1631 = vpow.pop %v1630
        %v1632 = vmul.f32 %v1590, 1.442695
        %v1633 = vpow.pop %v1632
        %v1634 = vmul.f32 %v1591, 1.442695
        %v1635 = vpow.pop %v1634
        %v1636 = vmul.f32 %v1592, 1.442695
        %v1637 = vpow.pop %v1636
        %v1638 = vmul.f32 %v1593, 1.442695
        %v1639 = vpow.pop %v1638
        %v1640 = vmul.f32 %v1594, 1.442695
        %v1641 = vpow.pop %v1640
        %v1642 = vmul.f32 %v1595, 1.442695
        %v1643 = vpow.pop %v1642
        %v1644 = vmul.f32 %v1596, 1.442695
        %v1645 = vpow.pop %v1644
        %v1646 = vmul.f32 %v1597, 1.442695
        %v1647 = vpow.pop %v1646
        %v1648 = vmul.f32 %v1598, 1.442695
        %v1649 = vpow.pop %v1648
        %v1650 = vmul.f32 %v1599, 1.442695
        %v1651 = vpow.pop %v1650
        %v1652 = vmul.f32 %v1600, 1.442695
        %v1653 = vpow.pop %v1652
        %v1654 = vmul.f32 %v1601, 1.442695
        %v1655 = vpow.pop %v1654
        %v1656 = vmul.f32 %v1602, 1.442695
        %v1657 = vpow.pop %v1656
        %v1658 = vmul.f32 %v1603, 1.442695
        %v1659 = vpow.pop %v1658
        %v1660 = vmul.f32 %v1604, 1.442695
        %v1661 = vpow.pop %v1660
        %v1662 = vmul.f32 %v1605, 1.442695
        %v1663 = vpow.pop %v1662
        %v1664 = vmul.f32 %v1606, 1.442695
        %v1665 = vpow.pop %v1664
        %v1666 = vmul.f32 %v1607, 1.442695
        %v1667 = vpow.pop %v1666
        %v1668 = vmul.f32 %v1608, 1.442695
        %v1669 = vpow.pop %v1668
        %v1670 = vmul.f32 %v1609, 1.442695
        %v1671 = vpow.pop %v1670
        %v1672 = vmul.f32 %v1610, 1.442695
        %v1673 = vpow.pop %v1672
        %v1674 = vmul.f32 %v1611, 1.442695
        %v1675 = vpow.pop %v1674
        %v1676 = vadd.f32 %v1613, 1.0
        %v1677 = vadd.f32 %v1615, 1.0
        %v1678 = vadd.f32 %v1617, 1.0
        %v1679 = vadd.f32 %v1619, 1.0
        %v1680 = vadd.f32 %v1621, 1.0
        %v1681 = vadd.f32 %v1623, 1.0
        %v1682 = vadd.f32 %v1625, 1.0
        %v1683 = vadd.f32 %v1627, 1.0
        %v1684 = vadd.f32 %v1629, 1.0
        %v1685 = vadd.f32 %v1631, 1.0
        %v1686 = vadd.f32 %v1633, 1.0
        %v1687 = vadd.f32 %v1635, 1.0
        %v1688 = vadd.f32 %v1637, 1.0
        %v1689 = vadd.f32 %v1639, 1.0
        %v1690 = vadd.f32 %v1641, 1.0
        %v1691 = vadd.f32 %v1643, 1.0
        %v1692 = vadd.f32 %v1645, 1.0
        %v1693 = vadd.f32 %v1647, 1.0
        %v1694 = vadd.f32 %v1649, 1.0
        %v1695 = vadd.f32 %v1651, 1.0
        %v1696 = vadd.f32 %v1653, 1.0
        %v1697 = vadd.f32 %v1655, 1.0
        %v1698 = vadd.f32 %v1657, 1.0
        %v1699 = vadd.f32 %v1659, 1.0
        %v1700 = vadd.f32 %v1661, 1.0
        %v1701 = vadd.f32 %v1663, 1.0
        %v1702 = vadd.f32 %v1665, 1.0
        %v1703 = vadd.f32 %v1667, 1.0
        %v1704 = vadd.f32 %v1669, 1.0
        %v1705 = vadd.f32 %v1671, 1.0
        %v1706 = vadd.f32 %v1673, 1.0
        %v1707 = vadd.f32 %v1675, 1.0
        %v1708 = vrcp.pop %v1676
        %v1709 = vmul.f32 1.0, %v1708
        %v1710 = vrcp.pop %v1677
        %v1711 = vmul.f32 1.0, %v1710
        %v1712 = vrcp.pop %v1678
        %v1713 = vmul.f32 1.0, %v1712
        %v1714 = vrcp.pop %v1679
        %v1715 = vmul.f32 1.0, %v1714
        %v1716 = vrcp.pop %v1680
        %v1717 = vmul.f32 1.0, %v1716
        %v1718 = vrcp.pop %v1681
        %v1719 = vmul.f32 1.0, %v1718
        %v1720 = vrcp.pop %v1682
        %v1721 = vmul.f32 1.0, %v1720
        %v1722 = vrcp.pop %v1683
        %v1723 = vmul.f32 1.0, %v1722
        %v1724 = vrcp.pop %v1684
        %v1725 = vmul.f32 1.0, %v1724
        %v1726 = vrcp.pop %v1685
        %v1727 = vmul.f32 1.0, %v1726
        %v1728 = vrcp.pop %v1686
        %v1729 = vmul.f32 1.0, %v1728
        %v1730 = vrcp.pop %v1687
        %v1731 = vmul.f32 1.0, %v1730
        %v1732 = vrcp.pop %v1688
        %v1733 = vmul.f32 1.0, %v1732
        %v1734 = vrcp.pop %v1689
        %v1735 = vmul.f32 1.0, %v1734
        %v1736 = vrcp.pop %v1690
        %v1737 = vmul.f32 1.0, %v1736
        %v1738 = vrcp.pop %v1691
        %v1739 = vmul.f32 1.0, %v1738
        %v1740 = vrcp.pop %v1692
        %v1741 = vmul.f32 1.0, %v1740
        %v1742 = vrcp.pop %v1693
        %v1743 = vmul.f32 1.0, %v1742
        %v1744 = vrcp.pop %v1694
        %v1745 = vmul.f32 1.0, %v1744
        %v1746 = vrcp.pop %v1695
        %v1747 = vmul.f32 1.0, %v1746
        %v1748 = vrcp.pop %v1696
        %v1749 = vmul.f32 1.0, %v1748
        %v1750 = vrcp.pop %v1697
        %v1751 = vmul.f32 1.0, %v1750
        %v1752 = vrcp.pop %v1698
        %v1753 = vmul.f32 1.0, %v1752
        %v1754 = vrcp.pop %v1699
        %v1755 = vmul.f32 1.0, %v1754
        %v1756 = vrcp.pop %v1700
        %v1757 = vmul.f32 1.0, %v1756
        %v1758 = vrcp.pop %v1701
        %v1759 = vmul.f32 1.0, %v1758
        %v1760 = vrcp.pop %v1702
        %v1761 = vmul.f32 1.0, %v1760
        %v1762 = vrcp.pop %v1703
        %v1763 = vmul.f32 1.0, %v1762
        %v1764 = vrcp.pop %v1704
        %v1765 = vmul.f32 1.0, %v1764
        %v1766 = vrcp.pop %v1705
        %v1767 = vmul.f32 1.0, %v1766
        %v1768 = vrcp.pop %v1706
        %v1769 = vmul.f32 1.0, %v1768
        %v1770 = vrcp.pop %v1707
        %v1771 = vmul.f32 1.0, %v1770
        %v1772 = vpack.c.bf16 %v1711, %v1709
        %v1773 = vpack.c.bf16 %v1715, %v1713
        %v1774 = vpack.c.bf16 %v1719, %v1717
        %v1775 = vpack.c.bf16 %v1723, %v1721
        %v1776 = vpack.c.bf16 %v1727, %v1725
        %v1777 = vpack.c.bf16 %v1731, %v1729
        %v1778 = vpack.c.bf16 %v1735, %v1733
        %v1779 = vpack.c.bf16 %v1739, %v1737
        %v1780 = vpack.c.bf16 %v1743, %v1741
        %v1781 = vpack.c.bf16 %v1747, %v1745
        %v1782 = vpack.c.bf16 %v1751, %v1749
        %v1783 = vpack.c.bf16 %v1755, %v1753
        %v1784 = vpack.c.bf16 %v1759, %v1757
        %v1785 = vpack.c.bf16 %v1763, %v1761
        %v1786 = vpack.c.bf16 %v1767, %v1765
        %v1787 = vpack.c.bf16 %v1771, %v1769
        %v1804 = vunpack.c.l.b16 %v1772
        %v1805 = vunpack.c.h.b16 %v1772
        %v1806 = vunpack.c.l.b16 %v1773
        %v1807 = vunpack.c.h.b16 %v1773
        %v1808 = vunpack.c.l.b16 %v1774
        %v1809 = vunpack.c.h.b16 %v1774
        %v1810 = vunpack.c.l.b16 %v1775
        %v1811 = vunpack.c.h.b16 %v1775
        %v1812 = vunpack.c.l.b16 %v1776
        %v1813 = vunpack.c.h.b16 %v1776
        %v1814 = vunpack.c.l.b16 %v1777
        %v1815 = vunpack.c.h.b16 %v1777
        %v1816 = vunpack.c.l.b16 %v1778
        %v1817 = vunpack.c.h.b16 %v1778
        %v1818 = vunpack.c.l.b16 %v1779
        %v1819 = vunpack.c.h.b16 %v1779
        %v1820 = vunpack.c.l.b16 %v1780
        %v1821 = vunpack.c.h.b16 %v1780
        %v1822 = vunpack.c.l.b16 %v1781
        %v1823 = vunpack.c.h.b16 %v1781
        %v1824 = vunpack.c.l.b16 %v1782
        %v1825 = vunpack.c.h.b16 %v1782
        %v1826 = vunpack.c.l.b16 %v1783
        %v1827 = vunpack.c.h.b16 %v1783
        %v1828 = vunpack.c.l.b16 %v1784
        %v1829 = vunpack.c.h.b16 %v1784
        %v1830 = vunpack.c.l.b16 %v1785
        %v1831 = vunpack.c.h.b16 %v1785
        %v1832 = vunpack.c.l.b16 %v1786
        %v1833 = vunpack.c.h.b16 %v1786
        %v1834 = vunpack.c.l.b16 %v1787
        %v1835 = vunpack.c.h.b16 %v1787
        %v1836 = vpack.c.b16 %v1804, %v1804
        %v1837 = vpack.c.b16 %v1805, %v1805
        %v1838 = vpack.c.b16 %v1806, %v1806
        %v1839 = vpack.c.b16 %v1807, %v1807
        %v1840 = vpack.c.b16 %v1808, %v1808
        %v1841 = vpack.c.b16 %v1809, %v1809
        %v1842 = vpack.c.b16 %v1810, %v1810
        %v1843 = vpack.c.b16 %v1811, %v1811
        %v1844 = vpack.c.b16 %v1812, %v1812
        %v1845 = vpack.c.b16 %v1813, %v1813
        %v1846 = vpack.c.b16 %v1814, %v1814
        %v1847 = vpack.c.b16 %v1815, %v1815
        %v1848 = vpack.c.b16 %v1816, %v1816
        %v1849 = vpack.c.b16 %v1817, %v1817
        %v1850 = vpack.c.b16 %v1818, %v1818
        %v1851 = vpack.c.b16 %v1819, %v1819
        %v1852 = vpack.c.b16 %v1820, %v1820
        %v1853 = vpack.c.b16 %v1821, %v1821
        %v1854 = vpack.c.b16 %v1822, %v1822
        %v1855 = vpack.c.b16 %v1823, %v1823
        %v1856 = vpack.c.b16 %v1824, %v1824
        %v1857 = vpack.c.b16 %v1825, %v1825
        %v1858 = vpack.c.b16 %v1826, %v1826
        %v1859 = vpack.c.b16 %v1827, %v1827
        %v1860 = vpack.c.b16 %v1828, %v1828
        %v1861 = vpack.c.b16 %v1829, %v1829
        %v1862 = vpack.c.b16 %v1830, %v1830
        %v1863 = vpack.c.b16 %v1831, %v1831
        %v1864 = vpack.c.b16 %v1832, %v1832
        %v1865 = vpack.c.b16 %v1833, %v1833
        %v1866 = vpack.c.b16 %v1834, %v1834
        %v1867 = vpack.c.b16 %v1835, %v1835
        %1900 = vst [vmem:[%s408] sm:$0xf] %v1836
        %1901 = vst [vmem:[%s408 + $0x4] sm:$0xf] %v1837
        %1902 = vst [vmem:[%s408 + $0x8] sm:$0xf] %v1838
        %1903 = vst [vmem:[%s408 + $0xc] sm:$0xf] %v1839
        %1904 = vst [vmem:[%s408 + $0x10] sm:$0xf] %v1840
        %1905 = vst [vmem:[%s408 + $0x14] sm:$0xf] %v1841
        %1906 = vst [vmem:[%s408 + $0x18] sm:$0xf] %v1842
        %1907 = vst [vmem:[%s408 + $0x1c] sm:$0xf] %v1843
        %1908 = vst [vmem:[%s408 + $0x20] sm:$0xf] %v1844
        %1909 = vst [vmem:[%s408 + $0x24] sm:$0xf] %v1845
        %1910 = vst [vmem:[%s408 + $0x28] sm:$0xf] %v1846
        %1911 = vst [vmem:[%s408 + $0x2c] sm:$0xf] %v1847
        %1912 = vst [vmem:[%s408 + $0x30] sm:$0xf] %v1848
        %1913 = vst [vmem:[%s408 + $0x34] sm:$0xf] %v1849
        %1914 = vst [vmem:[%s408 + $0x38] sm:$0xf] %v1850
        %1915 = vst [vmem:[%s408 + $0x3c] sm:$0xf] %v1851
        %1916 = vst [vmem:[%s408 + $0x40] sm:$0xf] %v1852
        %1917 = vst [vmem:[%s408 + $0x44] sm:$0xf] %v1853
        %1918 = vst [vmem:[%s408 + $0x48] sm:$0xf] %v1854
        %1919 = vst [vmem:[%s408 + $0x4c] sm:$0xf] %v1855
        %1920 = vst [vmem:[%s408 + $0x50] sm:$0xf] %v1856
        %1921 = vst [vmem:[%s408 + $0x54] sm:$0xf] %v1857
        %1922 = vst [vmem:[%s408 + $0x58] sm:$0xf] %v1858
        %1923 = vst [vmem:[%s408 + $0x5c] sm:$0xf] %v1859
        %1924 = vst [vmem:[%s408 + $0x60] sm:$0xf] %v1860
        %1925 = vst [vmem:[%s408 + $0x64] sm:$0xf] %v1861
        %1926 = vst [vmem:[%s408 + $0x68] sm:$0xf] %v1862
        %1927 = vst [vmem:[%s408 + $0x6c] sm:$0xf] %v1863
        %1928 = vst [vmem:[%s408 + $0x70] sm:$0xf] %v1864
        %1929 = vst [vmem:[%s408 + $0x74] sm:$0xf] %v1865
        %1930 = vst [vmem:[%s408 + $0x78] sm:$0xf] %v1866
        %1931 = vst [vmem:[%s408 + $0x7c] sm:$0xf] %v1867
        %s1932 = sand.u32 %s230, 1
        %s1933 = scalar_lea.sflag [#allocation4], %s1932
        %s1934 = sand.u32 %s230, 1
        %s1935 = smul.addr %s1934, 128
        %s1936 = scalar_lea.vmem [#allocation11], %s1935
        // Predicated region
        $region77: #{tpu_custom_call.1} parent=55 // pred_check
          %p1937 = pneg %p240
        $region78: #{tpu_custom_call.1} parent=55 // pred_check_branch
          %1939 = sbr.rel (%p1937) target = $region80
        $region79: #{tpu_custom_call.1} parent=55 // pred_region
          %s1940 = smul.u32 32, %s28
          %s1942 = ssub.s32 2048, 2048
          %1943 = vsyncadd %s1933, %s1942
          %s1944 = smul.addr %s1940, 64
          %s1945 = scalar_lea.hbm %s9, %s1944
          %s1946 = sshll.u32 %s1936, 4
          %s1947 = int_to_ptr.vmem [resolvable:$true] %s1946
          %1952 = dma.vmem_to_hbm [thread:$0]  %s1947, 2048, %s1945, %s1933, 64, 64, 4
        $region80: #{tpu_custom_call.1} parent=55 // pred_fallthru
          _
      $region56: #{tpu_custom_call.1} parent=5 // pred_fallthru
        _
      %p1953 = scmp.le.s32.totalorder 2, %s23
      // Predicated region
      $region81: #{tpu_custom_call.1} parent=5 // pred_check
        %p1954 = pneg %p1953
      $region82: #{tpu_custom_call.1} parent=5 // pred_check_branch
        %1956 = sbr.rel (%p1954) target = $region84
      $region83: #{tpu_custom_call.1} parent=5 // pred_region
        %s1957 = ssub.s32 %s23, 2
        // Predicated region
        $region85: #{tpu_custom_call.1} parent=83 // pred_check
          %p1958 = pneg %p246
        $region86: #{tpu_custom_call.1} parent=83 // pred_check_branch
          %1960 = sbr.rel (%p1958) target = $region88
        $region87: #{tpu_custom_call.1} parent=83 // pred_region
          %s1961 = sand.u32 %s231, 1
          %s1962 = scalar_lea.sflag [#allocation4], %s1961
          %s1963 = sand.u32 %s231, 1
          %s1964 = smul.addr %s1963, 128
          %s1965 = scalar_lea.vmem [#allocation11], %s1964
          %1966 = dma.done %s1962, 2048
        $region88: #{tpu_custom_call.1} parent=83 // pred_fallthru
          _
      $region84: #{tpu_custom_call.1} parent=5 // pred_fallthru
        _
    $region6: #{tpu_custom_call.1} parent=1 // loop_footer
      %s27 = sadd.s32 1, %s23
    $region7: #{tpu_custom_call.1} parent=1 // loop_footer_branch
      %22 = sbr.rel target = $region3
    $region8: #{tpu_custom_call.1} parent=1 // loop_exit
      _
    %1967 = vsyncpa [#allocation3], 1
    %s1968 = scalar_lea.sflag [#allocation3], 1
    %1969 = vsyncpa %s1968, 1
    %1970 = vsyncpa [#allocation6], 1
    %1971 = vsyncpa [#allocation9], 1
    %1972 = vsyncpa [#allocation4], 1
    %s1973 = scalar_lea.sflag [#allocation4], 1
    %1974 = vsyncpa %s1973, 1

</llo_original>
